<compile_context>
chip_gen: v7x
topology: tpu7x:2x2x1
jax: 0.10.0
libtpu: 0.0.40
codegen_flags: <defaults>
</compile_context>

<pallas_src>
import functools

import jax
import jax.numpy as jnp
from jax.experimental import pallas as pl
from jax.experimental.pallas import tpu as pltpu


def autopad(k, p=None):
    if p is None:
        p = k // 2 if isinstance(k, int) else [x // 2 for x in k]
    return p


def _round_up(x, m):
    return -(-x // m) * m


def _pick_tile(dim, candidates, align):
    """Pick the largest candidate tile whose padding waste stays small.

    Dims smaller than the smallest candidate are just rounded up to `align`.
    """
    smallest = candidates[-1]
    if dim <= smallest:
        return max(_round_up(dim, align), align)
    for t in candidates:  # descending
        waste = _round_up(dim, t) - dim
        if waste <= max(dim // 8, t // 8):
            return t
    return smallest


# --------------------------------------------------------------------------
# Fused (grouped im2col-matmul + BatchNorm affine + SiLU) Pallas kernel
# --------------------------------------------------------------------------
def _fused_matmul_kernel(use_silu, p_ref, w_ref, scale_ref, shift_ref, o_ref,
                         acc_ref):
    kk = pl.program_id(3)

    @pl.when(kk == 0)
    def _():
        acc_ref[...] = jnp.zeros_like(acc_ref)

    acc_ref[...] += jnp.dot(p_ref[...], w_ref[...],
                            preferred_element_type=jnp.float32)

    @pl.when(kk == pl.num_programs(3) - 1)
    def _():
        # Inference BatchNorm folded into a per-output-channel affine.
        y = acc_ref[...] * scale_ref[...] + shift_ref[...]
        if use_silu:
            y = y * jax.nn.sigmoid(y)          # SiLU fused in the epilogue
        o_ref[...] = y.astype(o_ref.dtype)


def _fused_matmul(patches, w2d, scale, shift, *, use_silu, out_dtype):
    """(G, M, K) @ (G, K, Nc) with fused BN affine + SiLU, via the MXU."""
    G, M, K = patches.shape
    _, _, Nc = w2d.shape

    # dtype-aware sublane granularity (f32: 8, bf16: 16, int8/fp8: 32)
    sub = {4: 8, 2: 16, 1: 32}.get(jnp.dtype(patches.dtype).itemsize, 8)

    tile_m = _pick_tile(M, (1024, 512, 256), sub)
    tile_n = _pick_tile(Nc, (256, 128), 128)
    tile_k = _pick_tile(K, (512, 256, 128), 128)

    M_pad = _round_up(M, tile_m)
    N_pad = _round_up(Nc, tile_n)
    K_pad = _round_up(K, tile_k)

    if (M_pad, K_pad) != (M, K):
        patches = jnp.pad(patches, ((0, 0), (0, M_pad - M), (0, K_pad - K)))
    if (K_pad, N_pad) != (K, Nc):
        w2d = jnp.pad(w2d, ((0, 0), (0, K_pad - K), (0, N_pad - Nc)))
    scale = scale.astype(jnp.float32)
    shift = shift.astype(jnp.float32)
    if N_pad != Nc:
        scale = jnp.pad(scale, ((0, 0), (0, 0), (0, N_pad - Nc)))
        shift = jnp.pad(shift, ((0, 0), (0, 0), (0, N_pad - Nc)))

    grid = (G, M_pad // tile_m, N_pad // tile_n, K_pad // tile_k)

    out = pl.pallas_call(
        functools.partial(_fused_matmul_kernel, use_silu),
        out_shape=jax.ShapeDtypeStruct((G, M_pad, N_pad), out_dtype),
        grid=grid,
        in_specs=[
            pl.BlockSpec((None, tile_m, tile_k),
                         lambda gi, i, j, kk: (gi, i, kk)),
            pl.BlockSpec((None, tile_k, tile_n),
                         lambda gi, i, j, kk: (gi, kk, j)),
            pl.BlockSpec((None, 1, tile_n),
                         lambda gi, i, j, kk: (gi, 0, j)),
            pl.BlockSpec((None, 1, tile_n),
                         lambda gi, i, j, kk: (gi, 0, j)),
        ],
        out_specs=pl.BlockSpec((None, tile_m, tile_n),
                               lambda gi, i, j, kk: (gi, i, j)),
        scratch_shapes=[pltpu.VMEM((tile_m, tile_n), jnp.float32)],
        compiler_params=pltpu.CompilerParams(
            dimension_semantics=("parallel", "parallel", "parallel",
                                 "arbitrary"),
        ),
    )(patches, w2d, scale, shift)

    return out[:, :M, :Nc]


# --------------------------------------------------------------------------
# im2col (NHWC) and the full Conv-BN-SiLU forward
# --------------------------------------------------------------------------
def _im2col_nhwc(x_nhwc, k, s, p):
    N, H, W, C = x_nhwc.shape
    if p > 0:
        x_nhwc = jnp.pad(x_nhwc, ((0, 0), (p, p), (p, p), (0, 0)))
    H_out = (H + 2 * p - k) // s + 1
    W_out = (W + 2 * p - k) // s + 1
    cols = []
    for kh in range(k):
        for kw in range(k):
            cols.append(x_nhwc[:, kh:kh + s * H_out:s, kw:kw + s * W_out:s, :])
    patches = cols[0] if len(cols) == 1 else jnp.concatenate(cols, axis=-1)
    return patches.reshape(N * H_out * W_out, k * k * C), H_out, W_out


def conv_bn_silu(x_nchw, weight, gamma, beta, mean, var, eps, *, k, s, p, g,
                 use_silu):
    N, C1, H, W = x_nchw.shape
    C2 = weight.shape[0]
    c1g, c2g = C1 // g, C2 // g

    # Fold inference-mode BatchNorm into per-channel scale/shift (in f32).
    scale = gamma.astype(jnp.float32) / jnp.sqrt(var.astype(jnp.float32) + eps)
    shift = beta.astype(jnp.float32) - mean.astype(jnp.float32) * scale

    x_nhwc = jnp.transpose(x_nchw, (0, 2, 3, 1))

    # Build per-group im2col patches and weights, then run ONE fused kernel
    # over the whole (g, M, Kg) x (g, Kg, c2g) batch of matmuls.
    patches_list, w_list = [], []
    H_out = W_out = None
    for gi in range(g):
        x_g = x_nhwc[..., gi * c1g:(gi + 1) * c1g]
        patches_g, H_out, W_out = _im2col_nhwc(x_g, k, s, p)
        patches_list.append(patches_g)
        # (c2g, c1g, kh, kw) -> (kh, kw, c1g, c2g) -> (k*k*c1g, c2g) to match
        # the (kh, kw, c) column ordering produced by _im2col_nhwc.
        w_g = weight[gi * c2g:(gi + 1) * c2g]
        w_list.append(jnp.transpose(w_g, (2, 3, 1, 0)).reshape(k * k * c1g,
                                                               c2g))

    patches = (patches_list[0][None] if g == 1
               else jnp.stack(patches_list, axis=0))       # (g, M, Kg)
    w2d = (w_list[0][None] if g == 1
           else jnp.stack(w_list, axis=0))                 # (g, Kg, c2g)
    scale_g = scale.reshape(g, 1, c2g)
    shift_g = shift.reshape(g, 1, c2g)

    out = _fused_matmul(patches, w2d, scale_g, shift_g,
                        use_silu=use_silu, out_dtype=x_nchw.dtype)
    out = out.reshape(g, N, H_out, W_out, c2g)
    out = jnp.transpose(out, (1, 0, 4, 2, 3)).reshape(N, C2, H_out, W_out)
    return out


class Conv:
    """JAX/Pallas port of models/common.py::Conv (Conv2d -> BatchNorm2d -> SiLU)."""

    def __init__(self, c1, c2, k=1, s=1, p=None, g=1, act=True, *,
                 key=None, dtype=jnp.float32, eps=1e-5):
        # TODO(synk): non-square / tuple kernel sizes are not supported here.
        self.c1, self.c2, self.k, self.s, self.g = c1, c2, k, s, g
        self.p = autopad(k, p)
        # TODO(synk): arbitrary nn.Module activations are not supported; only
        # SiLU (act=True) or identity.
        self.use_silu = (act is True)
        self.eps = eps

        if key is None:
            key = jax.random.PRNGKey(0)
        fan_in = (c1 // g) * k * k
        bound = 1.0 / (fan_in ** 0.5)
        self.weight = jax.random.uniform(
            key, (c2, c1 // g, k, k), dtype=dtype, minval=-bound, maxval=bound)

        # BatchNorm2d parameters / running stats, default-initialized (inference).
        self.bn_gamma = jnp.ones((c2,), dtype)
        self.bn_beta = jnp.zeros((c2,), dtype)
        self.bn_mean = jnp.zeros((c2,), dtype)
        self.bn_var = jnp.ones((c2,), dtype)

    def __call__(self, x):
        return self.forward(x)

    def forward(self, x):
        return conv_bn_silu(
            x, self.weight, self.bn_gamma, self.bn_beta, self.bn_mean,
            self.bn_var, self.eps, k=self.k, s=self.s, p=self.p, g=self.g,
            use_silu=self.use_silu)


def _reference(x, conv):
    """XLA conv + folded BN + optional SiLU reference."""
    scale = conv.bn_gamma.astype(jnp.float32) / jnp.sqrt(
        conv.bn_var.astype(jnp.float32) + conv.eps)
    shift = conv.bn_beta.astype(jnp.float32) - conv.bn_mean.astype(
        jnp.float32) * scale
    ref = jax.lax.conv_general_dilated(
        x, conv.weight, window_strides=(conv.s, conv.s),
        padding=[(conv.p, conv.p), (conv.p, conv.p)],
        feature_group_count=conv.g,
        dimension_numbers=("NCHW", "OIHW", "NCHW"))
    ref = ref * scale[None, :, None, None] + shift[None, :, None, None]
    if conv.use_silu:
        ref = ref * jax.nn.sigmoid(ref)
    return ref.astype(x.dtype)


if __name__ == "__main__":
    key = jax.random.PRNGKey(0)
    kx, kw, kg, kb, km, kv, kx2, kw2 = jax.random.split(key, 8)

    # --- Test 1: Conv(4 -> 8, k=3, s=1), SiLU, non-trivial BN stats -------
    N, C1, H, W = 2, 4, 16, 16
    C2, K, S = 8, 3, 1
    x = jax.random.normal(kx, (N, C1, H, W), dtype=jnp.float32)

    conv = Conv(C1, C2, K, S, key=kw)
    conv.bn_gamma = jax.random.uniform(kg, (C2,), minval=0.5, maxval=1.5)
    conv.bn_beta = jax.random.normal(kb, (C2,)) * 0.1
    conv.bn_mean = jax.random.normal(km, (C2,)) * 0.1
    conv.bn_var = jax.random.uniform(kv, (C2,), minval=0.5, maxval=1.5)

    out = jax.block_until_ready(conv(x))
    ref = _reference(x, conv)
    assert out.shape == ref.shape, (out.shape, ref.shape)
    assert out.dtype == ref.dtype
    assert jnp.allclose(out, ref, atol=1e-3, rtol=1e-3), float(
        jnp.max(jnp.abs(out - ref)))

    # --- Test 2: grouped, strided, no activation: Conv(4->6, k=1, s=2, g=2)
    x2 = jax.random.normal(kx2, (2, 4, 16, 16), dtype=jnp.float32)
    conv2 = Conv(4, 6, 1, 2, g=2, act=False, key=kw2)
    out2 = jax.block_until_ready(conv2(x2))
    ref2 = _reference(x2, conv2)
    assert out2.shape == ref2.shape, (out2.shape, ref2.shape)
    assert jnp.allclose(out2, ref2, atol=1e-3, rtol=1e-3), float(
        jnp.max(jnp.abs(out2 - ref2)))

    print("KERNEL_OK")
</pallas_src>

<mosaic_0001>
module attributes {stable_mosaic.version = 11 : i64} {
  func.func @_fused_matmul_kernel(%arg0: i32, %arg1: i32, %arg2: i32, %arg3: i32, %arg4: memref<1x512x128xf32, #tpu.memory_space<vmem>>, %arg5: memref<1x128x128xf32, #tpu.memory_space<vmem>>, %arg6: memref<1x1x128xf32, #tpu.memory_space<vmem>>, %arg7: memref<1x1x128xf32, #tpu.memory_space<vmem>>, %arg8: memref<1x512x128xf32, #tpu.memory_space<vmem>>, %arg9: memref<512x128xf32, #tpu.memory_space<vmem>>) attributes {dimension_semantics = [#tpu.dimension_semantics<parallel>, #tpu.dimension_semantics<parallel>, #tpu.dimension_semantics<parallel>, #tpu.dimension_semantics<arbitrary>], iteration_bounds = array<i64: 1, 1, 1, 1>, scalar_prefetch = 0 : i64, scratch_operands = 1 : i64, tpu.core_type = #tpu.core_type<tc>, window_params = [{transform_indices = @transform_0, window_bounds = array<i64: 1, 512, 128>}, {transform_indices = @transform_1, window_bounds = array<i64: 1, 128, 128>}, {transform_indices = @transform_2, window_bounds = array<i64: 1, 1, 128>}, {transform_indices = @transform_3, window_bounds = array<i64: 1, 1, 128>}, {transform_indices = @transform_4, window_bounds = array<i64: 1, 512, 128>}]} {
    %c0_i32 = arith.constant 0 : i32
    %0 = arith.cmpi eq, %arg3, %c0_i32 : i32
    %1 = arith.extui %0 : i1 to i32
    %c0_i32_0 = arith.constant 0 : i32
    %2 = arith.cmpi ne, %1, %c0_i32_0 : i32
    scf.if %2 {
      %cst_12 = arith.constant 0.000000e+00 : f32
      %14 = vector.broadcast %cst_12 : f32 to vector<512x128xf32>
      %c0_13 = arith.constant 0 : index
      %c0_14 = arith.constant 0 : index
      %15 = vector.load %arg9[%c0_13, %c0_14] : memref<512x128xf32, #tpu.memory_space<vmem>>, vector<512x128xf32>
      tpu.vector_store %arg9[%c0_13, %c0_14], %14 {strides = array<i32>} : memref<512x128xf32, #tpu.memory_space<vmem>>, vector<512x128xf32>,
    } else {
    }
    %c0 = arith.constant 0 : index
    %c0_1 = arith.constant 0 : index
    %3 = vector.load %arg9[%c0, %c0_1] : memref<512x128xf32, #tpu.memory_space<vmem>>, vector<512x128xf32>
    %c0_2 = arith.constant 0 : index
    %c0_3 = arith.constant 0 : index
    %c0_4 = arith.constant 0 : index
    %4 = vector.load %arg4[%c0_2, %c0_3, %c0_4] : memref<1x512x128xf32, #tpu.memory_space<vmem>>, vector<1x512x128xf32>
    %5 = vector.shape_cast %4 : vector<1x512x128xf32> to vector<512x128xf32>
    %c0_5 = arith.constant 0 : index
    %c0_6 = arith.constant 0 : index
    %c0_7 = arith.constant 0 : index
    %6 = vector.load %arg5[%c0_5, %c0_6, %c0_7] : memref<1x128x128xf32, #tpu.memory_space<vmem>>, vector<1x128x128xf32>
    %7 = vector.shape_cast %6 : vector<1x128x128xf32> to vector<128x128xf32>
    %cst = arith.constant dense<0.000000e+00> : vector<512x128xf32>
    %8 = tpu.matmul %5, %7, %cst {dimension_numbers = #tpu.dot_dimension_numbers<[1], [0], [0], [1], [0, 0, 1, 1], [], []>} : vector<512x128xf32>, vector<128x128xf32>, vector<512x128xf32> -> vector<512x128xf32>
    %9 = arith.addf %3, %8 : vector<512x128xf32>
    %c0_8 = arith.constant 0 : index
    %c0_9 = arith.constant 0 : index
    %10 = vector.load %arg9[%c0_8, %c0_9] : memref<512x128xf32, #tpu.memory_space<vmem>>, vector<512x128xf32>
    tpu.vector_store %arg9[%c0_8, %c0_9], %9 {strides = array<i32>} : memref<512x128xf32, #tpu.memory_space<vmem>>, vector<512x128xf32>,
    %c0_i32_10 = arith.constant 0 : i32
    %11 = arith.cmpi eq, %arg3, %c0_i32_10 : i32
    %12 = arith.extui %11 : i1 to i32
    %c0_i32_11 = arith.constant 0 : i32
    %13 = arith.cmpi ne, %12, %c0_i32_11 : i32
    scf.if %13 {
      %c0_12 = arith.constant 0 : index
      %c0_13 = arith.constant 0 : index
      %14 = vector.load %arg9[%c0_12, %c0_13] : memref<512x128xf32, #tpu.memory_space<vmem>>, vector<512x128xf32>
      %c0_14 = arith.constant 0 : index
      %c0_15 = arith.constant 0 : index
      %c0_16 = arith.constant 0 : index
      %15 = vector.load %arg6[%c0_14, %c0_15, %c0_16] : memref<1x1x128xf32, #tpu.memory_space<vmem>>, vector<1x1x128xf32>
      %16 = vector.shape_cast %15 : vector<1x1x128xf32> to vector<1x128xf32>
      %17 = vector.broadcast %16 : vector<1x128xf32> to vector<512x128xf32>
      %18 = arith.mulf %14, %17 : vector<512x128xf32>
      %c0_17 = arith.constant 0 : index
      %c0_18 = arith.constant 0 : index
      %c0_19 = arith.constant 0 : index
      %19 = vector.load %arg7[%c0_17, %c0_18, %c0_19] : memref<1x1x128xf32, #tpu.memory_space<vmem>>, vector<1x1x128xf32>
      %20 = vector.shape_cast %19 : vector<1x1x128xf32> to vector<1x128xf32>
      %21 = vector.broadcast %20 : vector<1x128xf32> to vector<512x128xf32>
      %22 = arith.addf %18, %21 : vector<512x128xf32>
      %23 = arith.negf %22 : vector<512x128xf32>
      %24 = math.exp %23 : vector<512x128xf32>
      %cst_20 = arith.constant 1.000000e+00 : f32
      %25 = vector.broadcast %cst_20 : f32 to vector<512x128xf32>
      %26 = arith.addf %25, %24 : vector<512x128xf32>
      %27 = arith.divf %25, %26 : vector<512x128xf32>
      %28 = arith.mulf %22, %27 : vector<512x128xf32>
      %c0_21 = arith.constant 0 : index
      %c0_22 = arith.constant 0 : index
      %c0_23 = arith.constant 0 : index
      %29 = vector.load %arg8[%c0_21, %c0_22, %c0_23] : memref<1x512x128xf32, #tpu.memory_space<vmem>>, vector<1x512x128xf32>
      %30 = vector.shape_cast %29 : vector<1x512x128xf32> to vector<512x128xf32>
      %31 = vector.shape_cast %28 : vector<512x128xf32> to vector<1x512x128xf32>
      tpu.vector_store %arg8[%c0_21, %c0_22, %c0_23], %31 {strides = array<i32>} : memref<1x512x128xf32, #tpu.memory_space<vmem>>, vector<1x512x128xf32>,
    } else {
    }
    return
  }
  func.func @transform_0(%arg0: i32, %arg1: i32, %arg2: i32, %arg3: i32) -> (i32, i32, i32) {
    %c0_i32 = arith.constant 0 : i32
    return %arg0, %arg1, %arg3 : i32, i32, i32
  }
  func.func @transform_1(%arg0: i32, %arg1: i32, %arg2: i32, %arg3: i32) -> (i32, i32, i32) {
    %c0_i32 = arith.constant 0 : i32
    return %arg0, %arg3, %arg2 : i32, i32, i32
  }
  func.func @transform_2(%arg0: i32, %arg1: i32, %arg2: i32, %arg3: i32) -> (i32, i32, i32) {
    %c0_i32 = arith.constant 0 : i32
    %c0_i32_0 = arith.constant 0 : i32
    return %arg0, %c0_i32, %arg2 : i32, i32, i32
  }
  func.func @transform_3(%arg0: i32, %arg1: i32, %arg2: i32, %arg3: i32) -> (i32, i32, i32) {
    %c0_i32 = arith.constant 0 : i32
    %c0_i32_0 = arith.constant 0 : i32
    return %arg0, %c0_i32, %arg2 : i32, i32, i32
  }
  func.func @transform_4(%arg0: i32, %arg1: i32, %arg2: i32, %arg3: i32) -> (i32, i32, i32) {
    %c0_i32 = arith.constant 0 : i32
    return %arg0, %arg1, %arg2 : i32, i32, i32
  }
}

</mosaic_0001>

<llo_original>
// kernel: tpu_custom_call.1
$region0: #{tpu_custom_call.1}
  #allocation0 [shape = 'u32[]', space=smem, size = 0x4, offset = 0x4, fixed_abs, tag = 'smem constant byte address 0x4 - core index']
  #allocation1 [shape = 'u32[144,128]{1,0:T(1,128)}', space=vmem, size = 0x12000, scoped, tag = 'internal scratch']
  #allocation2 [shape = 'f32[512,128]{1,0:T(8,128)}', space=vmem, size = 0x40000, scoped, tag = 'scratch operand']
  %s0 = inlined_call_operand.hbm [shape: f32[1,512,128], index: 0, kind: input, shape index: {}]
  %s1 = inlined_call_operand.hbm [shape: f32[1,128,128], index: 1, kind: input, shape index: {}]
  %s2 = inlined_call_operand.vmem [shape: f32[1,1,128], index: 2, kind: input, shape index: {}]
  %s3 = inlined_call_operand.vmem [shape: f32[1,1,128], index: 3, kind: input, shape index: {}]
  %s4 = inlined_call_operand.hbm [shape: f32[1,512,128], index: 4, kind: output, shape index: {}]
  %s5 = sld [smem:[#allocation0]]
  $region42: #{tpu_custom_call.1} parent=0
    _
  %s7 = ssub.s32 1, %s5
  %s8 = scalar_select 0, %s7, %s5
  $region1: #{tpu_custom_call.1} parent=0
    #allocation3 [shape = 'u8[262144]{0}', space=vmem, size = 0x40000, scoped, tag = 'input window, operand 0, single buffered']
    #allocation4 [shape = 's32[1]{0}', space=sflag, size = 0x4, scoped, tag = 'scoped memory for tpu_custom_call.1']
    #allocation5 [shape = 's32[1]{0}', space=sflag, size = 0x4, scoped, tag = 'scoped memory for tpu_custom_call.1']
    #allocation6 [shape = 'u8[65536]{0}', space=vmem, size = 0x10000, scoped, tag = 'input window, operand 1, single buffered']
    #allocation7 [shape = 's32[1]{0}', space=sflag, size = 0x4, scoped, tag = 'scoped memory for tpu_custom_call.1']
    #allocation8 [shape = 'u8[262144]{0}', space=vmem, size = 0x40000, scoped, tag = 'output window, operand 0, single buffered']
    %9 = vsyncpa [#allocation4], 0
    %10 = vsyncpa [#allocation7], 0
    %11 = vsyncpa [#allocation5], 0
    // Predicated region
    $region2: #{tpu_custom_call.1} parent=1 // pred_check
      _
    $region3: #{tpu_custom_call.1} parent=1 // pred_check_branch
      %13 = sbr.rel (0) target = $region5
    $region4: #{tpu_custom_call.1} parent=1 // pred_region
      %s15 = ssub.s32 8192, 8192
      %16 = vsyncadd [#allocation4], %s15
      %s17 = sshll.u32 [#allocation3], 4
      %s18 = int_to_ptr.vmem [resolvable:$true] %s17
      %23 = dma.hbm_to_vmem [thread:$0]  %s0, 8192, %s18, [#allocation4], 128, 128, 8
    $region5: #{tpu_custom_call.1} parent=1 // pred_fallthru
      _
    // Predicated region
    $region6: #{tpu_custom_call.1} parent=1 // pred_check
      _
    $region7: #{tpu_custom_call.1} parent=1 // pred_check_branch
      %25 = sbr.rel (0) target = $region9
    $region8: #{tpu_custom_call.1} parent=1 // pred_region
      %s27 = ssub.s32 2048, 2048
      %28 = vsyncadd [#allocation7], %s27
      %s29 = sshll.u32 [#allocation6], 4
      %s30 = int_to_ptr.vmem [resolvable:$true] %s29
      %35 = dma.hbm_to_vmem [thread:$0]  %s1, 2048, %s30, [#allocation7], 128, 128, 8
    $region9: #{tpu_custom_call.1} parent=1 // pred_fallthru
      _
    // Predicated region
    $region10: #{tpu_custom_call.1} parent=1 // pred_check
      _
    $region11: #{tpu_custom_call.1} parent=1 // pred_check_branch
      %37 = sbr.rel (0) target = $region13
    $region12: #{tpu_custom_call.1} parent=1 // pred_region
      _
    $region13: #{tpu_custom_call.1} parent=1 // pred_fallthru
      _
    // Predicated region
    $region14: #{tpu_custom_call.1} parent=1 // pred_check
      _
    $region15: #{tpu_custom_call.1} parent=1 // pred_check_branch
      %39 = sbr.rel (0) target = $region17
    $region16: #{tpu_custom_call.1} parent=1 // pred_region
      _
    $region17: #{tpu_custom_call.1} parent=1 // pred_fallthru
      _
    // Predicated region
    $region18: #{tpu_custom_call.1} parent=1 // pred_check
      _
    $region19: #{tpu_custom_call.1} parent=1 // pred_check_branch
      %41 = sbr.rel (0) target = $region21
    $region20: #{tpu_custom_call.1} parent=1 // pred_region
      %42 = dma.done [#allocation4], 8192
    $region21: #{tpu_custom_call.1} parent=1 // pred_fallthru
      _
    // Predicated region
    $region22: #{tpu_custom_call.1} parent=1 // pred_check
      _
    $region23: #{tpu_custom_call.1} parent=1 // pred_check_branch
      %44 = sbr.rel (0) target = $region25
    $region24: #{tpu_custom_call.1} parent=1 // pred_region
      %45 = dma.done [#allocation7], 2048
    $region25: #{tpu_custom_call.1} parent=1 // pred_fallthru
      _
    %p46 = scmp.eq.s32.totalorder 0, 0
    // Predicated region
    $region26: #{tpu_custom_call.1} parent=1 // pred_check
      %p47 = pneg %p46
    $region27: #{tpu_custom_call.1} parent=1 // pred_check_branch
      %49 = sbr.rel (%p47) target = $region29
    $region28: #{tpu_custom_call.1} parent=1 // pred_region
      %50 = vst [vmem:[#allocation2] sm:$0xff] 0.0
      %51 = vst [vmem:[#allocation2 + $0x8] sm:$0xff] 0.0
      %52 = vst [vmem:[#allocation2 + $0x10] sm:$0xff] 0.0
      %53 = vst [vmem:[#allocation2 + $0x18] sm:$0xff] 0.0
      %54 = vst [vmem:[#allocation2 + $0x20] sm:$0xff] 0.0
      %55 = vst [vmem:[#allocation2 + $0x28] sm:$0xff] 0.0
      %56 = vst [vmem:[#allocation2 + $0x30] sm:$0xff] 0.0
      %57 = vst [vmem:[#allocation2 + $0x38] sm:$0xff] 0.0
      %58 = vst [vmem:[#allocation2 + $0x40] sm:$0xff] 0.0
      %59 = vst [vmem:[#allocation2 + $0x48] sm:$0xff] 0.0
      %60 = vst [vmem:[#allocation2 + $0x50] sm:$0xff] 0.0
      %61 = vst [vmem:[#allocation2 + $0x58] sm:$0xff] 0.0
      %62 = vst [vmem:[#allocation2 + $0x60] sm:$0xff] 0.0
      %63 = vst [vmem:[#allocation2 + $0x68] sm:$0xff] 0.0
      %64 = vst [vmem:[#allocation2 + $0x70] sm:$0xff] 0.0
      %65 = vst [vmem:[#allocation2 + $0x78] sm:$0xff] 0.0
      %66 = vst [vmem:[#allocation2 + $0x80] sm:$0xff] 0.0
      %67 = vst [vmem:[#allocation2 + $0x88] sm:$0xff] 0.0
      %68 = vst [vmem:[#allocation2 + $0x90] sm:$0xff] 0.0
      %69 = vst [vmem:[#allocation2 + $0x98] sm:$0xff] 0.0
      %70 = vst [vmem:[#allocation2 + $0xa0] sm:$0xff] 0.0
      %71 = vst [vmem:[#allocation2 + $0xa8] sm:$0xff] 0.0
      %72 = vst [vmem:[#allocation2 + $0xb0] sm:$0xff] 0.0
      %73 = vst [vmem:[#allocation2 + $0xb8] sm:$0xff] 0.0
      %74 = vst [vmem:[#allocation2 + $0xc0] sm:$0xff] 0.0
      %75 = vst [vmem:[#allocation2 + $0xc8] sm:$0xff] 0.0
      %76 = vst [vmem:[#allocation2 + $0xd0] sm:$0xff] 0.0
      %77 = vst [vmem:[#allocation2 + $0xd8] sm:$0xff] 0.0
      %78 = vst [vmem:[#allocation2 + $0xe0] sm:$0xff] 0.0
      %79 = vst [vmem:[#allocation2 + $0xe8] sm:$0xff] 0.0
      %80 = vst [vmem:[#allocation2 + $0xf0] sm:$0xff] 0.0
      %81 = vst [vmem:[#allocation2 + $0xf8] sm:$0xff] 0.0
      %82 = vst [vmem:[#allocation2 + $0x100] sm:$0xff] 0.0
      %83 = vst [vmem:[#allocation2 + $0x108] sm:$0xff] 0.0
      %84 = vst [vmem:[#allocation2 + $0x110] sm:$0xff] 0.0
      %85 = vst [vmem:[#allocation2 + $0x118] sm:$0xff] 0.0
      %86 = vst [vmem:[#allocation2 + $0x120] sm:$0xff] 0.0
      %87 = vst [vmem:[#allocation2 + $0x128] sm:$0xff] 0.0
      %88 = vst [vmem:[#allocation2 + $0x130] sm:$0xff] 0.0
      %89 = vst [vmem:[#allocation2 + $0x138] sm:$0xff] 0.0
      %90 = vst [vmem:[#allocation2 + $0x140] sm:$0xff] 0.0
      %91 = vst [vmem:[#allocation2 + $0x148] sm:$0xff] 0.0
      %92 = vst [vmem:[#allocation2 + $0x150] sm:$0xff] 0.0
      %93 = vst [vmem:[#allocation2 + $0x158] sm:$0xff] 0.0
      %94 = vst [vmem:[#allocation2 + $0x160] sm:$0xff] 0.0
      %95 = vst [vmem:[#allocation2 + $0x168] sm:$0xff] 0.0
      %96 = vst [vmem:[#allocation2 + $0x170] sm:$0xff] 0.0
      %97 = vst [vmem:[#allocation2 + $0x178] sm:$0xff] 0.0
      %98 = vst [vmem:[#allocation2 + $0x180] sm:$0xff] 0.0
      %99 = vst [vmem:[#allocation2 + $0x188] sm:$0xff] 0.0
      %100 = vst [vmem:[#allocation2 + $0x190] sm:$0xff] 0.0
      %101 = vst [vmem:[#allocation2 + $0x198] sm:$0xff] 0.0
      %102 = vst [vmem:[#allocation2 + $0x1a0] sm:$0xff] 0.0
      %103 = vst [vmem:[#allocation2 + $0x1a8] sm:$0xff] 0.0
      %104 = vst [vmem:[#allocation2 + $0x1b0] sm:$0xff] 0.0
      %105 = vst [vmem:[#allocation2 + $0x1b8] sm:$0xff] 0.0
      %106 = vst [vmem:[#allocation2 + $0x1c0] sm:$0xff] 0.0
      %107 = vst [vmem:[#allocation2 + $0x1c8] sm:$0xff] 0.0
      %108 = vst [vmem:[#allocation2 + $0x1d0] sm:$0xff] 0.0
      %109 = vst [vmem:[#allocation2 + $0x1d8] sm:$0xff] 0.0
      %110 = vst [vmem:[#allocation2 + $0x1e0] sm:$0xff] 0.0
      %111 = vst [vmem:[#allocation2 + $0x1e8] sm:$0xff] 0.0
      %112 = vst [vmem:[#allocation2 + $0x1f0] sm:$0xff] 0.0
      %113 = vst [vmem:[#allocation2 + $0x1f8] sm:$0xff] 0.0
    $region29: #{tpu_custom_call.1} parent=1 // pred_fallthru
      _
    %v114 = vld [vmem:[#allocation2] sm:$0xff]
    %v115 = vld [vmem:[#allocation2 + $0x8] sm:$0xff]
    %v116 = vld [vmem:[#allocation2 + $0x10] sm:$0xff]
    %v117 = vld [vmem:[#allocation2 + $0x18] sm:$0xff]
    %v118 = vld [vmem:[#allocation2 + $0x20] sm:$0xff]
    %v119 = vld [vmem:[#allocation2 + $0x28] sm:$0xff]
    %v120 = vld [vmem:[#allocation2 + $0x30] sm:$0xff]
    %v121 = vld [vmem:[#allocation2 + $0x38] sm:$0xff]
    %v122 = vld [vmem:[#allocation2 + $0x40] sm:$0xff]
    %v123 = vld [vmem:[#allocation2 + $0x48] sm:$0xff]
    %v124 = vld [vmem:[#allocation2 + $0x50] sm:$0xff]
    %v125 = vld [vmem:[#allocation2 + $0x58] sm:$0xff]
    %v126 = vld [vmem:[#allocation2 + $0x60] sm:$0xff]
    %v127 = vld [vmem:[#allocation2 + $0x68] sm:$0xff]
    %v128 = vld [vmem:[#allocation2 + $0x70] sm:$0xff]
    %v129 = vld [vmem:[#allocation2 + $0x78] sm:$0xff]
    %v130 = vld [vmem:[#allocation2 + $0x80] sm:$0xff]
    %v131 = vld [vmem:[#allocation2 + $0x88] sm:$0xff]
    %v132 = vld [vmem:[#allocation2 + $0x90] sm:$0xff]
    %v133 = vld [vmem:[#allocation2 + $0x98] sm:$0xff]
    %v134 = vld [vmem:[#allocation2 + $0xa0] sm:$0xff]
    %v135 = vld [vmem:[#allocation2 + $0xa8] sm:$0xff]
    %v136 = vld [vmem:[#allocation2 + $0xb0] sm:$0xff]
    %v137 = vld [vmem:[#allocation2 + $0xb8] sm:$0xff]
    %v138 = vld [vmem:[#allocation2 + $0xc0] sm:$0xff]
    %v139 = vld [vmem:[#allocation2 + $0xc8] sm:$0xff]
    %v140 = vld [vmem:[#allocation2 + $0xd0] sm:$0xff]
    %v141 = vld [vmem:[#allocation2 + $0xd8] sm:$0xff]
    %v142 = vld [vmem:[#allocation2 + $0xe0] sm:$0xff]
    %v143 = vld [vmem:[#allocation2 + $0xe8] sm:$0xff]
    %v144 = vld [vmem:[#allocation2 + $0xf0] sm:$0xff]
    %v145 = vld [vmem:[#allocation2 + $0xf8] sm:$0xff]
    %v146 = vld [vmem:[#allocation2 + $0x100] sm:$0xff]
    %v147 = vld [vmem:[#allocation2 + $0x108] sm:$0xff]
    %v148 = vld [vmem:[#allocation2 + $0x110] sm:$0xff]
    %v149 = vld [vmem:[#allocation2 + $0x118] sm:$0xff]
    %v150 = vld [vmem:[#allocation2 + $0x120] sm:$0xff]
    %v151 = vld [vmem:[#allocation2 + $0x128] sm:$0xff]
    %v152 = vld [vmem:[#allocation2 + $0x130] sm:$0xff]
    %v153 = vld [vmem:[#allocation2 + $0x138] sm:$0xff]
    %v154 = vld [vmem:[#allocation2 + $0x140] sm:$0xff]
    %v155 = vld [vmem:[#allocation2 + $0x148] sm:$0xff]
    %v156 = vld [vmem:[#allocation2 + $0x150] sm:$0xff]
    %v157 = vld [vmem:[#allocation2 + $0x158] sm:$0xff]
    %v158 = vld [vmem:[#allocation2 + $0x160] sm:$0xff]
    %v159 = vld [vmem:[#allocation2 + $0x168] sm:$0xff]
    %v160 = vld [vmem:[#allocation2 + $0x170] sm:$0xff]
    %v161 = vld [vmem:[#allocation2 + $0x178] sm:$0xff]
    %v162 = vld [vmem:[#allocation2 + $0x180] sm:$0xff]
    %v163 = vld [vmem:[#allocation2 + $0x188] sm:$0xff]
    %v164 = vld [vmem:[#allocation2 + $0x190] sm:$0xff]
    %v165 = vld [vmem:[#allocation2 + $0x198] sm:$0xff]
    %v166 = vld [vmem:[#allocation2 + $0x1a0] sm:$0xff]
    %v167 = vld [vmem:[#allocation2 + $0x1a8] sm:$0xff]
    %v168 = vld [vmem:[#allocation2 + $0x1b0] sm:$0xff]
    %v169 = vld [vmem:[#allocation2 + $0x1b8] sm:$0xff]
    %v170 = vld [vmem:[#allocation2 + $0x1c0] sm:$0xff]
    %v171 = vld [vmem:[#allocation2 + $0x1c8] sm:$0xff]
    %v172 = vld [vmem:[#allocation2 + $0x1d0] sm:$0xff]
    %v173 = vld [vmem:[#allocation2 + $0x1d8] sm:$0xff]
    %v174 = vld [vmem:[#allocation2 + $0x1e0] sm:$0xff]
    %v175 = vld [vmem:[#allocation2 + $0x1e8] sm:$0xff]
    %v176 = vld [vmem:[#allocation2 + $0x1f0] sm:$0xff]
    %v177 = vld [vmem:[#allocation2 + $0x1f8] sm:$0xff]
    %v178 = vld [vmem:[#allocation3] sm:$0xff]
    %v179 = vld [vmem:[#allocation3 + $0x8] sm:$0xff]
    %v180 = vld [vmem:[#allocation3 + $0x10] sm:$0xff]
    %v181 = vld [vmem:[#allocation3 + $0x18] sm:$0xff]
    %v182 = vld [vmem:[#allocation3 + $0x20] sm:$0xff]
    %v183 = vld [vmem:[#allocation3 + $0x28] sm:$0xff]
    %v184 = vld [vmem:[#allocation3 + $0x30] sm:$0xff]
    %v185 = vld [vmem:[#allocation3 + $0x38] sm:$0xff]
    %v186 = vld [vmem:[#allocation3 + $0x40] sm:$0xff]
    %v187 = vld [vmem:[#allocation3 + $0x48] sm:$0xff]
    %v188 = vld [vmem:[#allocation3 + $0x50] sm:$0xff]
    %v189 = vld [vmem:[#allocation3 + $0x58] sm:$0xff]
    %v190 = vld [vmem:[#allocation3 + $0x60] sm:$0xff]
    %v191 = vld [vmem:[#allocation3 + $0x68] sm:$0xff]
    %v192 = vld [vmem:[#allocation3 + $0x70] sm:$0xff]
    %v193 = vld [vmem:[#allocation3 + $0x78] sm:$0xff]
    %v194 = vld [vmem:[#allocation3 + $0x80] sm:$0xff]
    %v195 = vld [vmem:[#allocation3 + $0x88] sm:$0xff]
    %v196 = vld [vmem:[#allocation3 + $0x90] sm:$0xff]
    %v197 = vld [vmem:[#allocation3 + $0x98] sm:$0xff]
    %v198 = vld [vmem:[#allocation3 + $0xa0] sm:$0xff]
    %v199 = vld [vmem:[#allocation3 + $0xa8] sm:$0xff]
    %v200 = vld [vmem:[#allocation3 + $0xb0] sm:$0xff]
    %v201 = vld [vmem:[#allocation3 + $0xb8] sm:$0xff]
    %v202 = vld [vmem:[#allocation3 + $0xc0] sm:$0xff]
    %v203 = vld [vmem:[#allocation3 + $0xc8] sm:$0xff]
    %v204 = vld [vmem:[#allocation3 + $0xd0] sm:$0xff]
    %v205 = vld [vmem:[#allocation3 + $0xd8] sm:$0xff]
    %v206 = vld [vmem:[#allocation3 + $0xe0] sm:$0xff]
    %v207 = vld [vmem:[#allocation3 + $0xe8] sm:$0xff]
    %v208 = vld [vmem:[#allocation3 + $0xf0] sm:$0xff]
    %v209 = vld [vmem:[#allocation3 + $0xf8] sm:$0xff]
    %v210 = vld [vmem:[#allocation3 + $0x100] sm:$0xff]
    %v211 = vld [vmem:[#allocation3 + $0x108] sm:$0xff]
    %v212 = vld [vmem:[#allocation3 + $0x110] sm:$0xff]
    %v213 = vld [vmem:[#allocation3 + $0x118] sm:$0xff]
    %v214 = vld [vmem:[#allocation3 + $0x120] sm:$0xff]
    %v215 = vld [vmem:[#allocation3 + $0x128] sm:$0xff]
    %v216 = vld [vmem:[#allocation3 + $0x130] sm:$0xff]
    %v217 = vld [vmem:[#allocation3 + $0x138] sm:$0xff]
    %v218 = vld [vmem:[#allocation3 + $0x140] sm:$0xff]
    %v219 = vld [vmem:[#allocation3 + $0x148] sm:$0xff]
    %v220 = vld [vmem:[#allocation3 + $0x150] sm:$0xff]
    %v221 = vld [vmem:[#allocation3 + $0x158] sm:$0xff]
    %v222 = vld [vmem:[#allocation3 + $0x160] sm:$0xff]
    %v223 = vld [vmem:[#allocation3 + $0x168] sm:$0xff]
    %v224 = vld [vmem:[#allocation3 + $0x170] sm:$0xff]
    %v225 = vld [vmem:[#allocation3 + $0x178] sm:$0xff]
    %v226 = vld [vmem:[#allocation3 + $0x180] sm:$0xff]
    %v227 = vld [vmem:[#allocation3 + $0x188] sm:$0xff]
    %v228 = vld [vmem:[#allocation3 + $0x190] sm:$0xff]
    %v229 = vld [vmem:[#allocation3 + $0x198] sm:$0xff]
    %v230 = vld [vmem:[#allocation3 + $0x1a0] sm:$0xff]
    %v231 = vld [vmem:[#allocation3 + $0x1a8] sm:$0xff]
    %v232 = vld [vmem:[#allocation3 + $0x1b0] sm:$0xff]
    %v233 = vld [vmem:[#allocation3 + $0x1b8] sm:$0xff]
    %v234 = vld [vmem:[#allocation3 + $0x1c0] sm:$0xff]
    %v235 = vld [vmem:[#allocation3 + $0x1c8] sm:$0xff]
    %v236 = vld [vmem:[#allocation3 + $0x1d0] sm:$0xff]
    %v237 = vld [vmem:[#allocation3 + $0x1d8] sm:$0xff]
    %v238 = vld [vmem:[#allocation3 + $0x1e0] sm:$0xff]
    %v239 = vld [vmem:[#allocation3 + $0x1e8] sm:$0xff]
    %v240 = vld [vmem:[#allocation3 + $0x1f0] sm:$0xff]
    %v241 = vld [vmem:[#allocation3 + $0x1f8] sm:$0xff]
    %v242 = vld [vmem:[#allocation6] sm:$0xff]
    %v243 = vld [vmem:[#allocation6 + $0x8] sm:$0xff]
    %v244 = vld [vmem:[#allocation6 + $0x10] sm:$0xff]
    %v245 = vld [vmem:[#allocation6 + $0x18] sm:$0xff]
    %v246 = vld [vmem:[#allocation6 + $0x20] sm:$0xff]
    %v247 = vld [vmem:[#allocation6 + $0x28] sm:$0xff]
    %v248 = vld [vmem:[#allocation6 + $0x30] sm:$0xff]
    %v249 = vld [vmem:[#allocation6 + $0x38] sm:$0xff]
    %v250 = vld [vmem:[#allocation6 + $0x40] sm:$0xff]
    %v251 = vld [vmem:[#allocation6 + $0x48] sm:$0xff]
    %v252 = vld [vmem:[#allocation6 + $0x50] sm:$0xff]
    %v253 = vld [vmem:[#allocation6 + $0x58] sm:$0xff]
    %v254 = vld [vmem:[#allocation6 + $0x60] sm:$0xff]
    %v255 = vld [vmem:[#allocation6 + $0x68] sm:$0xff]
    %v256 = vld [vmem:[#allocation6 + $0x70] sm:$0xff]
    %v257 = vld [vmem:[#allocation6 + $0x78] sm:$0xff]
    %258 = vmatprep.subr.mxu0 0.0
    %259 = vmatpush1.msra.mxu0 %v242
    %260 = vmatprep.subr.mxu0 0.0
    %261 = vmatpush1.msra.mxu0 %v243
    %262 = vmatprep.subr.mxu0 0.0
    %263 = vmatpush1.msra.mxu0 %v244
    %264 = vmatprep.subr.mxu0 0.0
    %265 = vmatpush1.msra.mxu0 %v245
    %266 = vmatprep.subr.mxu0 0.0
    %267 = vmatpush1.msra.mxu0 %v246
    %268 = vmatprep.subr.mxu0 0.0
    %269 = vmatpush1.msra.mxu0 %v247
    %270 = vmatprep.subr.mxu0 0.0
    %271 = vmatpush1.msra.mxu0 %v248
    %272 = vmatprep.subr.mxu0 0.0
    %273 = vmatpush1.msra.mxu0 %v249
    %274 = vmatprep.subr.mxu0 0.0
    %275 = vmatpush1.msra.mxu0 %v250
    %276 = vmatprep.subr.mxu0 0.0
    %277 = vmatpush1.msra.mxu0 %v251
    %278 = vmatprep.subr.mxu0 0.0
    %279 = vmatpush1.msra.mxu0 %v252
    %280 = vmatprep.subr.mxu0 0.0
    %281 = vmatpush1.msra.mxu0 %v253
    %282 = vmatprep.subr.mxu0 0.0
    %283 = vmatpush1.msra.mxu0 %v254
    %284 = vmatprep.subr.mxu0 0.0
    %285 = vmatpush1.msra.mxu0 %v255
    %286 = vmatprep.subr.mxu0 0.0
    %287 = vmatpush1.msra.mxu0 %v256
    %288 = vmatprep.subr.mxu0 0.0
    %289 = vmatpush1.msra.mxu0 %v257
    %290 = vmatprep.subr.mxu0 0.0
    %291 = vmatpush1.msra.mxu0 0.0
    %292 = vmatprep.subr.mxu0 0.0
    %293 = vmatpush1.msra.mxu0 0.0
    %294 = vmatprep.subr.mxu0 0.0
    %295 = vmatpush1.msra.mxu0 0.0
    %296 = vmatprep.subr.mxu0 0.0
    %297 = vmatpush1.msra.mxu0 0.0
    %298 = vmatprep.subr.mxu0 0.0
    %299 = vmatpush1.msra.mxu0 0.0
    %300 = vmatprep.subr.mxu0 0.0
    %301 = vmatpush1.msra.mxu0 0.0
    %302 = vmatprep.subr.mxu0 0.0
    %303 = vmatpush1.msra.mxu0 0.0
    %304 = vmatprep.subr.mxu0 0.0
    %305 = vmatpush1.msra.mxu0 0.0
    %306 = vmatprep.subr.mxu0 0.0
    %307 = vmatpush1.msra.mxu0 0.0
    %308 = vmatprep.subr.mxu0 0.0
    %309 = vmatpush1.msra.mxu0 0.0
    %310 = vmatprep.subr.mxu0 0.0
    %311 = vmatpush1.msra.mxu0 0.0
    %312 = vmatprep.subr.mxu0 0.0
    %313 = vmatpush1.msra.mxu0 0.0
    %314 = vmatprep.subr.mxu0 0.0
    %315 = vmatpush1.msra.mxu0 0.0
    %316 = vmatprep.subr.mxu0 0.0
    %317 = vmatpush1.msra.mxu0 0.0
    %318 = vmatprep.subr.mxu0 0.0
    %319 = vmatpush1.msra.mxu0 0.0
    %320 = vmatprep.subr.mxu0 0.0
    %321 = vmatpush1.msra.mxu0 0.0
    %322 = vmatprep.mubr.f32.mxu0 0.0
    %323 = vmatmul.mubr.f32.gmra.mrb[0].mxu0 %v178
    %v324 = vpop.f32.mrb[0].mxu0
    %v325 = vadd.f32 0.0, %v324
    %v326 = vpop.f32.mrb[0].mxu0
    %327 = vmatprep.mubr.f32.mxu0 0.0
    %328 = vmatmul.mubr.f32.gmra.mrb[0].mxu0 %v179
    %v329 = vpop.f32.mrb[0].mxu0
    %v330 = vadd.f32 0.0, %v329
    %v331 = vpop.f32.mrb[0].mxu0
    %332 = vmatprep.mubr.f32.mxu0 0.0
    %333 = vmatmul.mubr.f32.gmra.mrb[0].mxu0 %v180
    %v334 = vpop.f32.mrb[0].mxu0
    %v335 = vadd.f32 0.0, %v334
    %v336 = vpop.f32.mrb[0].mxu0
    %337 = vmatprep.mubr.f32.mxu0 0.0
    %338 = vmatmul.mubr.f32.gmra.mrb[0].mxu0 %v181
    %v339 = vpop.f32.mrb[0].mxu0
    %v340 = vadd.f32 0.0, %v339
    %v341 = vpop.f32.mrb[0].mxu0
    %342 = vmatprep.mubr.f32.mxu0 0.0
    %343 = vmatmul.mubr.f32.gmra.mrb[0].mxu0 %v182
    %v344 = vpop.f32.mrb[0].mxu0
    %v345 = vadd.f32 0.0, %v344
    %v346 = vpop.f32.mrb[0].mxu0
    %347 = vmatprep.mubr.f32.mxu0 0.0
    %348 = vmatmul.mubr.f32.gmra.mrb[0].mxu0 %v183
    %v349 = vpop.f32.mrb[0].mxu0
    %v350 = vadd.f32 0.0, %v349
    %v351 = vpop.f32.mrb[0].mxu0
    %352 = vmatprep.mubr.f32.mxu0 0.0
    %353 = vmatmul.mubr.f32.gmra.mrb[0].mxu0 %v184
    %v354 = vpop.f32.mrb[0].mxu0
    %v355 = vadd.f32 0.0, %v354
    %v356 = vpop.f32.mrb[0].mxu0
    %357 = vmatprep.mubr.f32.mxu0 0.0
    %358 = vmatmul.mubr.f32.gmra.mrb[0].mxu0 %v185
    %v359 = vpop.f32.mrb[0].mxu0
    %v360 = vadd.f32 0.0, %v359
    %v361 = vpop.f32.mrb[0].mxu0
    %362 = vmatprep.mubr.f32.mxu0 0.0
    %363 = vmatmul.mubr.f32.gmra.mrb[0].mxu0 %v186
    %v364 = vpop.f32.mrb[0].mxu0
    %v365 = vadd.f32 0.0, %v364
    %v366 = vpop.f32.mrb[0].mxu0
    %367 = vmatprep.mubr.f32.mxu0 0.0
    %368 = vmatmul.mubr.f32.gmra.mrb[0].mxu0 %v187
    %v369 = vpop.f32.mrb[0].mxu0
    %v370 = vadd.f32 0.0, %v369
    %v371 = vpop.f32.mrb[0].mxu0
    %372 = vmatprep.mubr.f32.mxu0 0.0
    %373 = vmatmul.mubr.f32.gmra.mrb[0].mxu0 %v188
    %v374 = vpop.f32.mrb[0].mxu0
    %v375 = vadd.f32 0.0, %v374
    %v376 = vpop.f32.mrb[0].mxu0
    %377 = vmatprep.mubr.f32.mxu0 0.0
    %378 = vmatmul.mubr.f32.gmra.mrb[0].mxu0 %v189
    %v379 = vpop.f32.mrb[0].mxu0
    %v380 = vadd.f32 0.0, %v379
    %v381 = vpop.f32.mrb[0].mxu0
    %382 = vmatprep.mubr.f32.mxu0 0.0
    %383 = vmatmul.mubr.f32.gmra.mrb[0].mxu0 %v190
    %v384 = vpop.f32.mrb[0].mxu0
    %v385 = vadd.f32 0.0, %v384
    %v386 = vpop.f32.mrb[0].mxu0
    %387 = vmatprep.mubr.f32.mxu0 0.0
    %388 = vmatmul.mubr.f32.gmra.mrb[0].mxu0 %v191
    %v389 = vpop.f32.mrb[0].mxu0
    %v390 = vadd.f32 0.0, %v389
    %v391 = vpop.f32.mrb[0].mxu0
    %392 = vmatprep.mubr.f32.mxu0 0.0
    %393 = vmatmul.mubr.f32.gmra.mrb[0].mxu0 %v192
    %v394 = vpop.f32.mrb[0].mxu0
    %v395 = vadd.f32 0.0, %v394
    %v396 = vpop.f32.mrb[0].mxu0
    %397 = vmatprep.mubr.f32.mxu0 0.0
    %398 = vmatmul.mubr.f32.gmra.mrb[0].mxu0 %v193
    %v399 = vpop.f32.mrb[0].mxu0
    %v400 = vadd.f32 0.0, %v399
    %v401 = vpop.f32.mrb[0].mxu0
    %402 = vmatprep.mubr.f32.mxu0 0.0
    %403 = vmatmul.mubr.f32.gmra.mrb[0].mxu0 %v194
    %v404 = vpop.f32.mrb[0].mxu0
    %v405 = vadd.f32 0.0, %v404
    %v406 = vpop.f32.mrb[0].mxu0
    %407 = vmatprep.mubr.f32.mxu0 0.0
    %408 = vmatmul.mubr.f32.gmra.mrb[0].mxu0 %v195
    %v409 = vpop.f32.mrb[0].mxu0
    %v410 = vadd.f32 0.0, %v409
    %v411 = vpop.f32.mrb[0].mxu0
    %412 = vmatprep.mubr.f32.mxu0 0.0
    %413 = vmatmul.mubr.f32.gmra.mrb[0].mxu0 %v196
    %v414 = vpop.f32.mrb[0].mxu0
    %v415 = vadd.f32 0.0, %v414
    %v416 = vpop.f32.mrb[0].mxu0
    %417 = vmatprep.mubr.f32.mxu0 0.0
    %418 = vmatmul.mubr.f32.gmra.mrb[0].mxu0 %v197
    %v419 = vpop.f32.mrb[0].mxu0
    %v420 = vadd.f32 0.0, %v419
    %v421 = vpop.f32.mrb[0].mxu0
    %422 = vmatprep.mubr.f32.mxu0 0.0
    %423 = vmatmul.mubr.f32.gmra.mrb[0].mxu0 %v198
    %v424 = vpop.f32.mrb[0].mxu0
    %v425 = vadd.f32 0.0, %v424
    %v426 = vpop.f32.mrb[0].mxu0
    %427 = vmatprep.mubr.f32.mxu0 0.0
    %428 = vmatmul.mubr.f32.gmra.mrb[0].mxu0 %v199
    %v429 = vpop.f32.mrb[0].mxu0
    %v430 = vadd.f32 0.0, %v429
    %v431 = vpop.f32.mrb[0].mxu0
    %432 = vmatprep.mubr.f32.mxu0 0.0
    %433 = vmatmul.mubr.f32.gmra.mrb[0].mxu0 %v200
    %v434 = vpop.f32.mrb[0].mxu0
    %v435 = vadd.f32 0.0, %v434
    %v436 = vpop.f32.mrb[0].mxu0
    %437 = vmatprep.mubr.f32.mxu0 0.0
    %438 = vmatmul.mubr.f32.gmra.mrb[0].mxu0 %v201
    %v439 = vpop.f32.mrb[0].mxu0
    %v440 = vadd.f32 0.0, %v439
    %v441 = vpop.f32.mrb[0].mxu0
    %442 = vmatprep.mubr.f32.mxu0 0.0
    %443 = vmatmul.mubr.f32.gmra.mrb[0].mxu0 %v202
    %v444 = vpop.f32.mrb[0].mxu0
    %v445 = vadd.f32 0.0, %v444
    %v446 = vpop.f32.mrb[0].mxu0
    %447 = vmatprep.mubr.f32.mxu0 0.0
    %448 = vmatmul.mubr.f32.gmra.mrb[0].mxu0 %v203
    %v449 = vpop.f32.mrb[0].mxu0
    %v450 = vadd.f32 0.0, %v449
    %v451 = vpop.f32.mrb[0].mxu0
    %452 = vmatprep.mubr.f32.mxu0 0.0
    %453 = vmatmul.mubr.f32.gmra.mrb[0].mxu0 %v204
    %v454 = vpop.f32.mrb[0].mxu0
    %v455 = vadd.f32 0.0, %v454
    %v456 = vpop.f32.mrb[0].mxu0
    %457 = vmatprep.mubr.f32.mxu0 0.0
    %458 = vmatmul.mubr.f32.gmra.mrb[0].mxu0 %v205
    %v459 = vpop.f32.mrb[0].mxu0
    %v460 = vadd.f32 0.0, %v459
    %v461 = vpop.f32.mrb[0].mxu0
    %462 = vmatprep.mubr.f32.mxu0 0.0
    %463 = vmatmul.mubr.f32.gmra.mrb[0].mxu0 %v206
    %v464 = vpop.f32.mrb[0].mxu0
    %v465 = vadd.f32 0.0, %v464
    %v466 = vpop.f32.mrb[0].mxu0
    %467 = vmatprep.mubr.f32.mxu0 0.0
    %468 = vmatmul.mubr.f32.gmra.mrb[0].mxu0 %v207
    %v469 = vpop.f32.mrb[0].mxu0
    %v470 = vadd.f32 0.0, %v469
    %v471 = vpop.f32.mrb[0].mxu0
    %472 = vmatprep.mubr.f32.mxu0 0.0
    %473 = vmatmul.mubr.f32.gmra.mrb[0].mxu0 %v208
    %v474 = vpop.f32.mrb[0].mxu0
    %v475 = vadd.f32 0.0, %v474
    %v476 = vpop.f32.mrb[0].mxu0
    %477 = vmatprep.mubr.f32.mxu0 0.0
    %478 = vmatmul.mubr.f32.gmra.mrb[0].mxu0 %v209
    %v479 = vpop.f32.mrb[0].mxu0
    %v480 = vadd.f32 0.0, %v479
    %v481 = vpop.f32.mrb[0].mxu0
    %482 = vmatprep.mubr.f32.mxu0 0.0
    %483 = vmatmul.mubr.f32.gmra.mrb[0].mxu0 %v210
    %v484 = vpop.f32.mrb[0].mxu0
    %v485 = vadd.f32 0.0, %v484
    %v486 = vpop.f32.mrb[0].mxu0
    %487 = vmatprep.mubr.f32.mxu0 0.0
    %488 = vmatmul.mubr.f32.gmra.mrb[0].mxu0 %v211
    %v489 = vpop.f32.mrb[0].mxu0
    %v490 = vadd.f32 0.0, %v489
    %v491 = vpop.f32.mrb[0].mxu0
    %492 = vmatprep.mubr.f32.mxu0 0.0
    %493 = vmatmul.mubr.f32.gmra.mrb[0].mxu0 %v212
    %v494 = vpop.f32.mrb[0].mxu0
    %v495 = vadd.f32 0.0, %v494
    %v496 = vpop.f32.mrb[0].mxu0
    %497 = vmatprep.mubr.f32.mxu0 0.0
    %498 = vmatmul.mubr.f32.gmra.mrb[0].mxu0 %v213
    %v499 = vpop.f32.mrb[0].mxu0
    %v500 = vadd.f32 0.0, %v499
    %v501 = vpop.f32.mrb[0].mxu0
    %502 = vmatprep.mubr.f32.mxu0 0.0
    %503 = vmatmul.mubr.f32.gmra.mrb[0].mxu0 %v214
    %v504 = vpop.f32.mrb[0].mxu0
    %v505 = vadd.f32 0.0, %v504
    %v506 = vpop.f32.mrb[0].mxu0
    %507 = vmatprep.mubr.f32.mxu0 0.0
    %508 = vmatmul.mubr.f32.gmra.mrb[0].mxu0 %v215
    %v509 = vpop.f32.mrb[0].mxu0
    %v510 = vadd.f32 0.0, %v509
    %v511 = vpop.f32.mrb[0].mxu0
    %512 = vmatprep.mubr.f32.mxu0 0.0
    %513 = vmatmul.mubr.f32.gmra.mrb[0].mxu0 %v216
    %v514 = vpop.f32.mrb[0].mxu0
    %v515 = vadd.f32 0.0, %v514
    %v516 = vpop.f32.mrb[0].mxu0
    %517 = vmatprep.mubr.f32.mxu0 0.0
    %518 = vmatmul.mubr.f32.gmra.mrb[0].mxu0 %v217
    %v519 = vpop.f32.mrb[0].mxu0
    %v520 = vadd.f32 0.0, %v519
    %v521 = vpop.f32.mrb[0].mxu0
    %522 = vmatprep.mubr.f32.mxu0 0.0
    %523 = vmatmul.mubr.f32.gmra.mrb[0].mxu0 %v218
    %v524 = vpop.f32.mrb[0].mxu0
    %v525 = vadd.f32 0.0, %v524
    %v526 = vpop.f32.mrb[0].mxu0
    %527 = vmatprep.mubr.f32.mxu0 0.0
    %528 = vmatmul.mubr.f32.gmra.mrb[0].mxu0 %v219
    %v529 = vpop.f32.mrb[0].mxu0
    %v530 = vadd.f32 0.0, %v529
    %v531 = vpop.f32.mrb[0].mxu0
    %532 = vmatprep.mubr.f32.mxu0 0.0
    %533 = vmatmul.mubr.f32.gmra.mrb[0].mxu0 %v220
    %v534 = vpop.f32.mrb[0].mxu0
    %v535 = vadd.f32 0.0, %v534
    %v536 = vpop.f32.mrb[0].mxu0
    %537 = vmatprep.mubr.f32.mxu0 0.0
    %538 = vmatmul.mubr.f32.gmra.mrb[0].mxu0 %v221
    %v539 = vpop.f32.mrb[0].mxu0
    %v540 = vadd.f32 0.0, %v539
    %v541 = vpop.f32.mrb[0].mxu0
    %542 = vmatprep.mubr.f32.mxu0 0.0
    %543 = vmatmul.mubr.f32.gmra.mrb[0].mxu0 %v222
    %v544 = vpop.f32.mrb[0].mxu0
    %v545 = vadd.f32 0.0, %v544
    %v546 = vpop.f32.mrb[0].mxu0
    %547 = vmatprep.mubr.f32.mxu0 0.0
    %548 = vmatmul.mubr.f32.gmra.mrb[0].mxu0 %v223
    %v549 = vpop.f32.mrb[0].mxu0
    %v550 = vadd.f32 0.0, %v549
    %v551 = vpop.f32.mrb[0].mxu0
    %552 = vmatprep.mubr.f32.mxu0 0.0
    %553 = vmatmul.mubr.f32.gmra.mrb[0].mxu0 %v224
    %v554 = vpop.f32.mrb[0].mxu0
    %v555 = vadd.f32 0.0, %v554
    %v556 = vpop.f32.mrb[0].mxu0
    %557 = vmatprep.mubr.f32.mxu0 0.0
    %558 = vmatmul.mubr.f32.gmra.mrb[0].mxu0 %v225
    %v559 = vpop.f32.mrb[0].mxu0
    %v560 = vadd.f32 0.0, %v559
    %v561 = vpop.f32.mrb[0].mxu0
    %562 = vmatprep.mubr.f32.mxu0 0.0
    %563 = vmatmul.mubr.f32.gmra.mrb[0].mxu0 %v226
    %v564 = vpop.f32.mrb[0].mxu0
    %v565 = vadd.f32 0.0, %v564
    %v566 = vpop.f32.mrb[0].mxu0
    %567 = vmatprep.mubr.f32.mxu0 0.0
    %568 = vmatmul.mubr.f32.gmra.mrb[0].mxu0 %v227
    %v569 = vpop.f32.mrb[0].mxu0
    %v570 = vadd.f32 0.0, %v569
    %v571 = vpop.f32.mrb[0].mxu0
    %572 = vmatprep.mubr.f32.mxu0 0.0
    %573 = vmatmul.mubr.f32.gmra.mrb[0].mxu0 %v228
    %v574 = vpop.f32.mrb[0].mxu0
    %v575 = vadd.f32 0.0, %v574
    %v576 = vpop.f32.mrb[0].mxu0
    %577 = vmatprep.mubr.f32.mxu0 0.0
    %578 = vmatmul.mubr.f32.gmra.mrb[0].mxu0 %v229
    %v579 = vpop.f32.mrb[0].mxu0
    %v580 = vadd.f32 0.0, %v579
    %v581 = vpop.f32.mrb[0].mxu0
    %582 = vmatprep.mubr.f32.mxu0 0.0
    %583 = vmatmul.mubr.f32.gmra.mrb[0].mxu0 %v230
    %v584 = vpop.f32.mrb[0].mxu0
    %v585 = vadd.f32 0.0, %v584
    %v586 = vpop.f32.mrb[0].mxu0
    %587 = vmatprep.mubr.f32.mxu0 0.0
    %588 = vmatmul.mubr.f32.gmra.mrb[0].mxu0 %v231
    %v589 = vpop.f32.mrb[0].mxu0
    %v590 = vadd.f32 0.0, %v589
    %v591 = vpop.f32.mrb[0].mxu0
    %592 = vmatprep.mubr.f32.mxu0 0.0
    %593 = vmatmul.mubr.f32.gmra.mrb[0].mxu0 %v232
    %v594 = vpop.f32.mrb[0].mxu0
    %v595 = vadd.f32 0.0, %v594
    %v596 = vpop.f32.mrb[0].mxu0
    %597 = vmatprep.mubr.f32.mxu0 0.0
    %598 = vmatmul.mubr.f32.gmra.mrb[0].mxu0 %v233
    %v599 = vpop.f32.mrb[0].mxu0
    %v600 = vadd.f32 0.0, %v599
    %v601 = vpop.f32.mrb[0].mxu0
    %602 = vmatprep.mubr.f32.mxu0 0.0
    %603 = vmatmul.mubr.f32.gmra.mrb[0].mxu0 %v234
    %v604 = vpop.f32.mrb[0].mxu0
    %v605 = vadd.f32 0.0, %v604
    %v606 = vpop.f32.mrb[0].mxu0
    %607 = vmatprep.mubr.f32.mxu0 0.0
    %608 = vmatmul.mubr.f32.gmra.mrb[0].mxu0 %v235
    %v609 = vpop.f32.mrb[0].mxu0
    %v610 = vadd.f32 0.0, %v609
    %v611 = vpop.f32.mrb[0].mxu0
    %612 = vmatprep.mubr.f32.mxu0 0.0
    %613 = vmatmul.mubr.f32.gmra.mrb[0].mxu0 %v236
    %v614 = vpop.f32.mrb[0].mxu0
    %v615 = vadd.f32 0.0, %v614
    %v616 = vpop.f32.mrb[0].mxu0
    %617 = vmatprep.mubr.f32.mxu0 0.0
    %618 = vmatmul.mubr.f32.gmra.mrb[0].mxu0 %v237
    %v619 = vpop.f32.mrb[0].mxu0
    %v620 = vadd.f32 0.0, %v619
    %v621 = vpop.f32.mrb[0].mxu0
    %622 = vmatprep.mubr.f32.mxu0 0.0
    %623 = vmatmul.mubr.f32.gmra.mrb[0].mxu0 %v238
    %v624 = vpop.f32.mrb[0].mxu0
    %v625 = vadd.f32 0.0, %v624
    %v626 = vpop.f32.mrb[0].mxu0
    %627 = vmatprep.mubr.f32.mxu0 0.0
    %628 = vmatmul.mubr.f32.gmra.mrb[0].mxu0 %v239
    %v629 = vpop.f32.mrb[0].mxu0
    %v630 = vadd.f32 0.0, %v629
    %v631 = vpop.f32.mrb[0].mxu0
    %632 = vmatprep.mubr.f32.mxu0 0.0
    %633 = vmatmul.mubr.f32.gmra.mrb[0].mxu0 %v240
    %v634 = vpop.f32.mrb[0].mxu0
    %v635 = vadd.f32 0.0, %v634
    %v636 = vpop.f32.mrb[0].mxu0
    %637 = vmatprep.mubr.f32.mxu0 0.0
    %638 = vmatmul.mubr.f32.gmra.mrb[0].mxu0 %v241
    %v639 = vpop.f32.mrb[0].mxu0
    %v640 = vadd.f32 0.0, %v639
    %v641 = vpop.f32.mrb[0].mxu0
    %642 = vdwg.mxu0
    %v643 = vadd.f32 %v114, %v325
    %v644 = vadd.f32 %v115, %v330
    %v645 = vadd.f32 %v116, %v335
    %v646 = vadd.f32 %v117, %v340
    %v647 = vadd.f32 %v118, %v345
    %v648 = vadd.f32 %v119, %v350
    %v649 = vadd.f32 %v120, %v355
    %v650 = vadd.f32 %v121, %v360
    %v651 = vadd.f32 %v122, %v365
    %v652 = vadd.f32 %v123, %v370
    %v653 = vadd.f32 %v124, %v375
    %v654 = vadd.f32 %v125, %v380
    %v655 = vadd.f32 %v126, %v385
    %v656 = vadd.f32 %v127, %v390
    %v657 = vadd.f32 %v128, %v395
    %v658 = vadd.f32 %v129, %v400
    %v659 = vadd.f32 %v130, %v405
    %v660 = vadd.f32 %v131, %v410
    %v661 = vadd.f32 %v132, %v415
    %v662 = vadd.f32 %v133, %v420
    %v663 = vadd.f32 %v134, %v425
    %v664 = vadd.f32 %v135, %v430
    %v665 = vadd.f32 %v136, %v435
    %v666 = vadd.f32 %v137, %v440
    %v667 = vadd.f32 %v138, %v445
    %v668 = vadd.f32 %v139, %v450
    %v669 = vadd.f32 %v140, %v455
    %v670 = vadd.f32 %v141, %v460
    %v671 = vadd.f32 %v142, %v465
    %v672 = vadd.f32 %v143, %v470
    %v673 = vadd.f32 %v144, %v475
    %v674 = vadd.f32 %v145, %v480
    %v675 = vadd.f32 %v146, %v485
    %v676 = vadd.f32 %v147, %v490
    %v677 = vadd.f32 %v148, %v495
    %v678 = vadd.f32 %v149, %v500
    %v679 = vadd.f32 %v150, %v505
    %v680 = vadd.f32 %v151, %v510
    %v681 = vadd.f32 %v152, %v515
    %v682 = vadd.f32 %v153, %v520
    %v683 = vadd.f32 %v154, %v525
    %v684 = vadd.f32 %v155, %v530
    %v685 = vadd.f32 %v156, %v535
    %v686 = vadd.f32 %v157, %v540
    %v687 = vadd.f32 %v158, %v545
    %v688 = vadd.f32 %v159, %v550
    %v689 = vadd.f32 %v160, %v555
    %v690 = vadd.f32 %v161, %v560
    %v691 = vadd.f32 %v162, %v565
    %v692 = vadd.f32 %v163, %v570
    %v693 = vadd.f32 %v164, %v575
    %v694 = vadd.f32 %v165, %v580
    %v695 = vadd.f32 %v166, %v585
    %v696 = vadd.f32 %v167, %v590
    %v697 = vadd.f32 %v168, %v595
    %v698 = vadd.f32 %v169, %v600
    %v699 = vadd.f32 %v170, %v605
    %v700 = vadd.f32 %v171, %v610
    %v701 = vadd.f32 %v172, %v615
    %v702 = vadd.f32 %v173, %v620
    %v703 = vadd.f32 %v174, %v625
    %v704 = vadd.f32 %v175, %v630
    %v705 = vadd.f32 %v176, %v635
    %v706 = vadd.f32 %v177, %v640
    %707 = vst [vmem:[#allocation2] sm:$0xff] %v643
    %708 = vst [vmem:[#allocation2 + $0x8] sm:$0xff] %v644
    %709 = vst [vmem:[#allocation2 + $0x10] sm:$0xff] %v645
    %710 = vst [vmem:[#allocation2 + $0x18] sm:$0xff] %v646
    %711 = vst [vmem:[#allocation2 + $0x20] sm:$0xff] %v647
    %712 = vst [vmem:[#allocation2 + $0x28] sm:$0xff] %v648
    %713 = vst [vmem:[#allocation2 + $0x30] sm:$0xff] %v649
    %714 = vst [vmem:[#allocation2 + $0x38] sm:$0xff] %v650
    %715 = vst [vmem:[#allocation2 + $0x40] sm:$0xff] %v651
    %716 = vst [vmem:[#allocation2 + $0x48] sm:$0xff] %v652
    %717 = vst [vmem:[#allocation2 + $0x50] sm:$0xff] %v653
    %718 = vst [vmem:[#allocation2 + $0x58] sm:$0xff] %v654
    %719 = vst [vmem:[#allocation2 + $0x60] sm:$0xff] %v655
    %720 = vst [vmem:[#allocation2 + $0x68] sm:$0xff] %v656
    %721 = vst [vmem:[#allocation2 + $0x70] sm:$0xff] %v657
    %722 = vst [vmem:[#allocation2 + $0x78] sm:$0xff] %v658
    %723 = vst [vmem:[#allocation2 + $0x80] sm:$0xff] %v659
    %724 = vst [vmem:[#allocation2 + $0x88] sm:$0xff] %v660
    %725 = vst [vmem:[#allocation2 + $0x90] sm:$0xff] %v661
    %726 = vst [vmem:[#allocation2 + $0x98] sm:$0xff] %v662
    %727 = vst [vmem:[#allocation2 + $0xa0] sm:$0xff] %v663
    %728 = vst [vmem:[#allocation2 + $0xa8] sm:$0xff] %v664
    %729 = vst [vmem:[#allocation2 + $0xb0] sm:$0xff] %v665
    %730 = vst [vmem:[#allocation2 + $0xb8] sm:$0xff] %v666
    %731 = vst [vmem:[#allocation2 + $0xc0] sm:$0xff] %v667
    %732 = vst [vmem:[#allocation2 + $0xc8] sm:$0xff] %v668
    %733 = vst [vmem:[#allocation2 + $0xd0] sm:$0xff] %v669
    %734 = vst [vmem:[#allocation2 + $0xd8] sm:$0xff] %v670
    %735 = vst [vmem:[#allocation2 + $0xe0] sm:$0xff] %v671
    %736 = vst [vmem:[#allocation2 + $0xe8] sm:$0xff] %v672
    %737 = vst [vmem:[#allocation2 + $0xf0] sm:$0xff] %v673
    %738 = vst [vmem:[#allocation2 + $0xf8] sm:$0xff] %v674
    %739 = vst [vmem:[#allocation2 + $0x100] sm:$0xff] %v675
    %740 = vst [vmem:[#allocation2 + $0x108] sm:$0xff] %v676
    %741 = vst [vmem:[#allocation2 + $0x110] sm:$0xff] %v677
    %742 = vst [vmem:[#allocation2 + $0x118] sm:$0xff] %v678
    %743 = vst [vmem:[#allocation2 + $0x120] sm:$0xff] %v679
    %744 = vst [vmem:[#allocation2 + $0x128] sm:$0xff] %v680
    %745 = vst [vmem:[#allocation2 + $0x130] sm:$0xff] %v681
    %746 = vst [vmem:[#allocation2 + $0x138] sm:$0xff] %v682
    %747 = vst [vmem:[#allocation2 + $0x140] sm:$0xff] %v683
    %748 = vst [vmem:[#allocation2 + $0x148] sm:$0xff] %v684
    %749 = vst [vmem:[#allocation2 + $0x150] sm:$0xff] %v685
    %750 = vst [vmem:[#allocation2 + $0x158] sm:$0xff] %v686
    %751 = vst [vmem:[#allocation2 + $0x160] sm:$0xff] %v687
    %752 = vst [vmem:[#allocation2 + $0x168] sm:$0xff] %v688
    %753 = vst [vmem:[#allocation2 + $0x170] sm:$0xff] %v689
    %754 = vst [vmem:[#allocation2 + $0x178] sm:$0xff] %v690
    %755 = vst [vmem:[#allocation2 + $0x180] sm:$0xff] %v691
    %756 = vst [vmem:[#allocation2 + $0x188] sm:$0xff] %v692
    %757 = vst [vmem:[#allocation2 + $0x190] sm:$0xff] %v693
    %758 = vst [vmem:[#allocation2 + $0x198] sm:$0xff] %v694
    %759 = vst [vmem:[#allocation2 + $0x1a0] sm:$0xff] %v695
    %760 = vst [vmem:[#allocation2 + $0x1a8] sm:$0xff] %v696
    %761 = vst [vmem:[#allocation2 + $0x1b0] sm:$0xff] %v697
    %762 = vst [vmem:[#allocation2 + $0x1b8] sm:$0xff] %v698
    %763 = vst [vmem:[#allocation2 + $0x1c0] sm:$0xff] %v699
    %764 = vst [vmem:[#allocation2 + $0x1c8] sm:$0xff] %v700
    %765 = vst [vmem:[#allocation2 + $0x1d0] sm:$0xff] %v701
    %766 = vst [vmem:[#allocation2 + $0x1d8] sm:$0xff] %v702
    %767 = vst [vmem:[#allocation2 + $0x1e0] sm:$0xff] %v703
    %768 = vst [vmem:[#allocation2 + $0x1e8] sm:$0xff] %v704
    %769 = vst [vmem:[#allocation2 + $0x1f0] sm:$0xff] %v705
    %770 = vst [vmem:[#allocation2 + $0x1f8] sm:$0xff] %v706
    // Predicated region
    $region30: #{tpu_custom_call.1} parent=1 // pred_check
      %p771 = pneg %p46
    $region31: #{tpu_custom_call.1} parent=1 // pred_check_branch
      %773 = sbr.rel (%p771) target = $region33
    $region32: #{tpu_custom_call.1} parent=1 // pred_region
      %v774 = vld [vmem:[#allocation2] sm:$0xff]
      %v775 = vld [vmem:[#allocation2 + $0x8] sm:$0xff]
      %v776 = vld [vmem:[#allocation2 + $0x10] sm:$0xff]
      %v777 = vld [vmem:[#allocation2 + $0x18] sm:$0xff]
      %v778 = vld [vmem:[#allocation2 + $0x20] sm:$0xff]
      %v779 = vld [vmem:[#allocation2 + $0x28] sm:$0xff]
      %v780 = vld [vmem:[#allocation2 + $0x30] sm:$0xff]
      %v781 = vld [vmem:[#allocation2 + $0x38] sm:$0xff]
      %v782 = vld [vmem:[#allocation2 + $0x40] sm:$0xff]
      %v783 = vld [vmem:[#allocation2 + $0x48] sm:$0xff]
      %v784 = vld [vmem:[#allocation2 + $0x50] sm:$0xff]
      %v785 = vld [vmem:[#allocation2 + $0x58] sm:$0xff]
      %v786 = vld [vmem:[#allocation2 + $0x60] sm:$0xff]
      %v787 = vld [vmem:[#allocation2 + $0x68] sm:$0xff]
      %v788 = vld [vmem:[#allocation2 + $0x70] sm:$0xff]
      %v789 = vld [vmem:[#allocation2 + $0x78] sm:$0xff]
      %v790 = vld [vmem:[#allocation2 + $0x80] sm:$0xff]
      %v791 = vld [vmem:[#allocation2 + $0x88] sm:$0xff]
      %v792 = vld [vmem:[#allocation2 + $0x90] sm:$0xff]
      %v793 = vld [vmem:[#allocation2 + $0x98] sm:$0xff]
      %v794 = vld [vmem:[#allocation2 + $0xa0] sm:$0xff]
      %v795 = vld [vmem:[#allocation2 + $0xa8] sm:$0xff]
      %v796 = vld [vmem:[#allocation2 + $0xb0] sm:$0xff]
      %v797 = vld [vmem:[#allocation2 + $0xb8] sm:$0xff]
      %v798 = vld [vmem:[#allocation2 + $0xc0] sm:$0xff]
      %v799 = vld [vmem:[#allocation2 + $0xc8] sm:$0xff]
      %v800 = vld [vmem:[#allocation2 + $0xd0] sm:$0xff]
      %v801 = vld [vmem:[#allocation2 + $0xd8] sm:$0xff]
      %v802 = vld [vmem:[#allocation2 + $0xe0] sm:$0xff]
      %v803 = vld [vmem:[#allocation2 + $0xe8] sm:$0xff]
      %v804 = vld [vmem:[#allocation2 + $0xf0] sm:$0xff]
      %v805 = vld [vmem:[#allocation2 + $0xf8] sm:$0xff]
      %v806 = vld [vmem:[#allocation2 + $0x100] sm:$0xff]
      %v807 = vld [vmem:[#allocation2 + $0x108] sm:$0xff]
      %v808 = vld [vmem:[#allocation2 + $0x110] sm:$0xff]
      %v809 = vld [vmem:[#allocation2 + $0x118] sm:$0xff]
      %v810 = vld [vmem:[#allocation2 + $0x120] sm:$0xff]
      %v811 = vld [vmem:[#allocation2 + $0x128] sm:$0xff]
      %v812 = vld [vmem:[#allocation2 + $0x130] sm:$0xff]
      %v813 = vld [vmem:[#allocation2 + $0x138] sm:$0xff]
      %v814 = vld [vmem:[#allocation2 + $0x140] sm:$0xff]
      %v815 = vld [vmem:[#allocation2 + $0x148] sm:$0xff]
      %v816 = vld [vmem:[#allocation2 + $0x150] sm:$0xff]
      %v817 = vld [vmem:[#allocation2 + $0x158] sm:$0xff]
      %v818 = vld [vmem:[#allocation2 + $0x160] sm:$0xff]
      %v819 = vld [vmem:[#allocation2 + $0x168] sm:$0xff]
      %v820 = vld [vmem:[#allocation2 + $0x170] sm:$0xff]
      %v821 = vld [vmem:[#allocation2 + $0x178] sm:$0xff]
      %v822 = vld [vmem:[#allocation2 + $0x180] sm:$0xff]
      %v823 = vld [vmem:[#allocation2 + $0x188] sm:$0xff]
      %v824 = vld [vmem:[#allocation2 + $0x190] sm:$0xff]
      %v825 = vld [vmem:[#allocation2 + $0x198] sm:$0xff]
      %v826 = vld [vmem:[#allocation2 + $0x1a0] sm:$0xff]
      %v827 = vld [vmem:[#allocation2 + $0x1a8] sm:$0xff]
      %v828 = vld [vmem:[#allocation2 + $0x1b0] sm:$0xff]
      %v829 = vld [vmem:[#allocation2 + $0x1b8] sm:$0xff]
      %v830 = vld [vmem:[#allocation2 + $0x1c0] sm:$0xff]
      %v831 = vld [vmem:[#allocation2 + $0x1c8] sm:$0xff]
      %v832 = vld [vmem:[#allocation2 + $0x1d0] sm:$0xff]
      %v833 = vld [vmem:[#allocation2 + $0x1d8] sm:$0xff]
      %v834 = vld [vmem:[#allocation2 + $0x1e0] sm:$0xff]
      %v835 = vld [vmem:[#allocation2 + $0x1e8] sm:$0xff]
      %v836 = vld [vmem:[#allocation2 + $0x1f0] sm:$0xff]
      %v837 = vld [vmem:[#allocation2 + $0x1f8] sm:$0xff]
      %v838 = vld [vmem:[%s2] sm:$0x1]
      %v840 = vlaneseq
      %v841 = vshrl.u32 %v840, 7
      %v842 = vsub.s32 0, %v841
      %v843 = vrot.slane %v838, %v842
      %v845 = vmul.f32 %v774, %v843
      %v846 = vmul.f32 %v775, %v843
      %v847 = vmul.f32 %v776, %v843
      %v848 = vmul.f32 %v777, %v843
      %v849 = vmul.f32 %v778, %v843
      %v850 = vmul.f32 %v779, %v843
      %v851 = vmul.f32 %v780, %v843
      %v852 = vmul.f32 %v781, %v843
      %v853 = vmul.f32 %v782, %v843
      %v854 = vmul.f32 %v783, %v843
      %v855 = vmul.f32 %v784, %v843
      %v856 = vmul.f32 %v785, %v843
      %v857 = vmul.f32 %v786, %v843
      %v858 = vmul.f32 %v787, %v843
      %v859 = vmul.f32 %v788, %v843
      %v860 = vmul.f32 %v789, %v843
      %v861 = vmul.f32 %v790, %v843
      %v862 = vmul.f32 %v791, %v843
      %v863 = vmul.f32 %v792, %v843
      %v864 = vmul.f32 %v793, %v843
      %v865 = vmul.f32 %v794, %v843
      %v866 = vmul.f32 %v795, %v843
      %v867 = vmul.f32 %v796, %v843
      %v868 = vmul.f32 %v797, %v843
      %v869 = vmul.f32 %v798, %v843
      %v870 = vmul.f32 %v799, %v843
      %v871 = vmul.f32 %v800, %v843
      %v872 = vmul.f32 %v801, %v843
      %v873 = vmul.f32 %v802, %v843
      %v874 = vmul.f32 %v803, %v843
      %v875 = vmul.f32 %v804, %v843
      %v876 = vmul.f32 %v805, %v843
      %v877 = vmul.f32 %v806, %v843
      %v878 = vmul.f32 %v807, %v843
      %v879 = vmul.f32 %v808, %v843
      %v880 = vmul.f32 %v809, %v843
      %v881 = vmul.f32 %v810, %v843
      %v882 = vmul.f32 %v811, %v843
      %v883 = vmul.f32 %v812, %v843
      %v884 = vmul.f32 %v813, %v843
      %v885 = vmul.f32 %v814, %v843
      %v886 = vmul.f32 %v815, %v843
      %v887 = vmul.f32 %v816, %v843
      %v888 = vmul.f32 %v817, %v843
      %v889 = vmul.f32 %v818, %v843
      %v890 = vmul.f32 %v819, %v843
      %v891 = vmul.f32 %v820, %v843
      %v892 = vmul.f32 %v821, %v843
      %v893 = vmul.f32 %v822, %v843
      %v894 = vmul.f32 %v823, %v843
      %v895 = vmul.f32 %v824, %v843
      %v896 = vmul.f32 %v825, %v843
      %v897 = vmul.f32 %v826, %v843
      %v898 = vmul.f32 %v827, %v843
      %v899 = vmul.f32 %v828, %v843
      %v900 = vmul.f32 %v829, %v843
      %v901 = vmul.f32 %v830, %v843
      %v902 = vmul.f32 %v831, %v843
      %v903 = vmul.f32 %v832, %v843
      %v904 = vmul.f32 %v833, %v843
      %v905 = vmul.f32 %v834, %v843
      %v906 = vmul.f32 %v835, %v843
      %v907 = vmul.f32 %v836, %v843
      %v908 = vmul.f32 %v837, %v843
      %v909 = vld [vmem:[%s3] sm:$0x1]
      %v911 = vlaneseq
      %v912 = vshrl.u32 %v911, 7
      %v913 = vsub.s32 0, %v912
      %v914 = vrot.slane %v909, %v913
      %v916 = vadd.f32 %v845, %v914
      %v917 = vadd.f32 %v846, %v914
      %v918 = vadd.f32 %v847, %v914
      %v919 = vadd.f32 %v848, %v914
      %v920 = vadd.f32 %v849, %v914
      %v921 = vadd.f32 %v850, %v914
      %v922 = vadd.f32 %v851, %v914
      %v923 = vadd.f32 %v852, %v914
      %v924 = vadd.f32 %v853, %v914
      %v925 = vadd.f32 %v854, %v914
      %v926 = vadd.f32 %v855, %v914
      %v927 = vadd.f32 %v856, %v914
      %v928 = vadd.f32 %v857, %v914
      %v929 = vadd.f32 %v858, %v914
      %v930 = vadd.f32 %v859, %v914
      %v931 = vadd.f32 %v860, %v914
      %v932 = vadd.f32 %v861, %v914
      %v933 = vadd.f32 %v862, %v914
      %v934 = vadd.f32 %v863, %v914
      %v935 = vadd.f32 %v864, %v914
      %v936 = vadd.f32 %v865, %v914
      %v937 = vadd.f32 %v866, %v914
      %v938 = vadd.f32 %v867, %v914
      %v939 = vadd.f32 %v868, %v914
      %v940 = vadd.f32 %v869, %v914
      %v941 = vadd.f32 %v870, %v914
      %v942 = vadd.f32 %v871, %v914
      %v943 = vadd.f32 %v872, %v914
      %v944 = vadd.f32 %v873, %v914
      %v945 = vadd.f32 %v874, %v914
      %v946 = vadd.f32 %v875, %v914
      %v947 = vadd.f32 %v876, %v914
      %v948 = vadd.f32 %v877, %v914
      %v949 = vadd.f32 %v878, %v914
      %v950 = vadd.f32 %v879, %v914
      %v951 = vadd.f32 %v880, %v914
      %v952 = vadd.f32 %v881, %v914
      %v953 = vadd.f32 %v882, %v914
      %v954 = vadd.f32 %v883, %v914
      %v955 = vadd.f32 %v884, %v914
      %v956 = vadd.f32 %v885, %v914
      %v957 = vadd.f32 %v886, %v914
      %v958 = vadd.f32 %v887, %v914
      %v959 = vadd.f32 %v888, %v914
      %v960 = vadd.f32 %v889, %v914
      %v961 = vadd.f32 %v890, %v914
      %v962 = vadd.f32 %v891, %v914
      %v963 = vadd.f32 %v892, %v914
      %v964 = vadd.f32 %v893, %v914
      %v965 = vadd.f32 %v894, %v914
      %v966 = vadd.f32 %v895, %v914
      %v967 = vadd.f32 %v896, %v914
      %v968 = vadd.f32 %v897, %v914
      %v969 = vadd.f32 %v898, %v914
      %v970 = vadd.f32 %v899, %v914
      %v971 = vadd.f32 %v900, %v914
      %v972 = vadd.f32 %v901, %v914
      %v973 = vadd.f32 %v902, %v914
      %v974 = vadd.f32 %v903, %v914
      %v975 = vadd.f32 %v904, %v914
      %v976 = vadd.f32 %v905, %v914
      %v977 = vadd.f32 %v906, %v914
      %v978 = vadd.f32 %v907, %v914
      %v979 = vadd.f32 %v908, %v914
      %v980 = vxor.u32 %v916, 2147483648
      %v981 = vxor.u32 %v917, 2147483648
      %v982 = vxor.u32 %v918, 2147483648
      %v983 = vxor.u32 %v919, 2147483648
      %v984 = vxor.u32 %v920, 2147483648
      %v985 = vxor.u32 %v921, 2147483648
      %v986 = vxor.u32 %v922, 2147483648
      %v987 = vxor.u32 %v923, 2147483648
      %v988 = vxor.u32 %v924, 2147483648
      %v989 = vxor.u32 %v925, 2147483648
      %v990 = vxor.u32 %v926, 2147483648
      %v991 = vxor.u32 %v927, 2147483648
      %v992 = vxor.u32 %v928, 2147483648
      %v993 = vxor.u32 %v929, 2147483648
      %v994 = vxor.u32 %v930, 2147483648
      %v995 = vxor.u32 %v931, 2147483648
      %v996 = vxor.u32 %v932, 2147483648
      %v997 = vxor.u32 %v933, 2147483648
      %v998 = vxor.u32 %v934, 2147483648
      %v999 = vxor.u32 %v935, 2147483648
      %v1000 = vxor.u32 %v936, 2147483648
      %v1001 = vxor.u32 %v937, 2147483648
      %v1002 = vxor.u32 %v938, 2147483648
      %v1003 = vxor.u32 %v939, 2147483648
      %v1004 = vxor.u32 %v940, 2147483648
      %v1005 = vxor.u32 %v941, 2147483648
      %v1006 = vxor.u32 %v942, 2147483648
      %v1007 = vxor.u32 %v943, 2147483648
      %v1008 = vxor.u32 %v944, 2147483648
      %v1009 = vxor.u32 %v945, 2147483648
      %v1010 = vxor.u32 %v946, 2147483648
      %v1011 = vxor.u32 %v947, 2147483648
      %v1012 = vxor.u32 %v948, 2147483648
      %v1013 = vxor.u32 %v949, 2147483648
      %v1014 = vxor.u32 %v950, 2147483648
      %v1015 = vxor.u32 %v951, 2147483648
      %v1016 = vxor.u32 %v952, 2147483648
      %v1017 = vxor.u32 %v953, 2147483648
      %v1018 = vxor.u32 %v954, 2147483648
      %v1019 = vxor.u32 %v955, 2147483648
      %v1020 = vxor.u32 %v956, 2147483648
      %v1021 = vxor.u32 %v957, 2147483648
      %v1022 = vxor.u32 %v958, 2147483648
      %v1023 = vxor.u32 %v959, 2147483648
      %v1024 = vxor.u32 %v960, 2147483648
      %v1025 = vxor.u32 %v961, 2147483648
      %v1026 = vxor.u32 %v962, 2147483648
      %v1027 = vxor.u32 %v963, 2147483648
      %v1028 = vxor.u32 %v964, 2147483648
      %v1029 = vxor.u32 %v965, 2147483648
      %v1030 = vxor.u32 %v966, 2147483648
      %v1031 = vxor.u32 %v967, 2147483648
      %v1032 = vxor.u32 %v968, 2147483648
      %v1033 = vxor.u32 %v969, 2147483648
      %v1034 = vxor.u32 %v970, 2147483648
      %v1035 = vxor.u32 %v971, 2147483648
      %v1036 = vxor.u32 %v972, 2147483648
      %v1037 = vxor.u32 %v973, 2147483648
      %v1038 = vxor.u32 %v974, 2147483648
      %v1039 = vxor.u32 %v975, 2147483648
      %v1040 = vxor.u32 %v976, 2147483648
      %v1041 = vxor.u32 %v977, 2147483648
      %v1042 = vxor.u32 %v978, 2147483648
      %v1043 = vxor.u32 %v979, 2147483648
      %v1044 = vmul.f32 %v980, 1.442695
      %v1045 = vpow.pop %v1044
      %v1046 = vmul.f32 %v981, 1.442695
      %v1047 = vpow.pop %v1046
      %v1048 = vmul.f32 %v982, 1.442695
      %v1049 = vpow.pop %v1048
      %v1050 = vmul.f32 %v983, 1.442695
      %v1051 = vpow.pop %v1050
      %v1052 = vmul.f32 %v984, 1.442695
      %v1053 = vpow.pop %v1052
      %v1054 = vmul.f32 %v985, 1.442695
      %v1055 = vpow.pop %v1054
      %v1056 = vmul.f32 %v986, 1.442695
      %v1057 = vpow.pop %v1056
      %v1058 = vmul.f32 %v987, 1.442695
      %v1059 = vpow.pop %v1058
      %v1060 = vmul.f32 %v988, 1.442695
      %v1061 = vpow.pop %v1060
      %v1062 = vmul.f32 %v989, 1.442695
      %v1063 = vpow.pop %v1062
      %v1064 = vmul.f32 %v990, 1.442695
      %v1065 = vpow.pop %v1064
      %v1066 = vmul.f32 %v991, 1.442695
      %v1067 = vpow.pop %v1066
      %v1068 = vmul.f32 %v992, 1.442695
      %v1069 = vpow.pop %v1068
      %v1070 = vmul.f32 %v993, 1.442695
      %v1071 = vpow.pop %v1070
      %v1072 = vmul.f32 %v994, 1.442695
      %v1073 = vpow.pop %v1072
      %v1074 = vmul.f32 %v995, 1.442695
      %v1075 = vpow.pop %v1074
      %v1076 = vmul.f32 %v996, 1.442695
      %v1077 = vpow.pop %v1076
      %v1078 = vmul.f32 %v997, 1.442695
      %v1079 = vpow.pop %v1078
      %v1080 = vmul.f32 %v998, 1.442695
      %v1081 = vpow.pop %v1080
      %v1082 = vmul.f32 %v999, 1.442695
      %v1083 = vpow.pop %v1082
      %v1084 = vmul.f32 %v1000, 1.442695
      %v1085 = vpow.pop %v1084
      %v1086 = vmul.f32 %v1001, 1.442695
      %v1087 = vpow.pop %v1086
      %v1088 = vmul.f32 %v1002, 1.442695
      %v1089 = vpow.pop %v1088
      %v1090 = vmul.f32 %v1003, 1.442695
      %v1091 = vpow.pop %v1090
      %v1092 = vmul.f32 %v1004, 1.442695
      %v1093 = vpow.pop %v1092
      %v1094 = vmul.f32 %v1005, 1.442695
      %v1095 = vpow.pop %v1094
      %v1096 = vmul.f32 %v1006, 1.442695
      %v1097 = vpow.pop %v1096
      %v1098 = vmul.f32 %v1007, 1.442695
      %v1099 = vpow.pop %v1098
      %v1100 = vmul.f32 %v1008, 1.442695
      %v1101 = vpow.pop %v1100
      %v1102 = vmul.f32 %v1009, 1.442695
      %v1103 = vpow.pop %v1102
      %v1104 = vmul.f32 %v1010, 1.442695
      %v1105 = vpow.pop %v1104
      %v1106 = vmul.f32 %v1011, 1.442695
      %v1107 = vpow.pop %v1106
      %v1108 = vmul.f32 %v1012, 1.442695
      %v1109 = vpow.pop %v1108
      %v1110 = vmul.f32 %v1013, 1.442695
      %v1111 = vpow.pop %v1110
      %v1112 = vmul.f32 %v1014, 1.442695
      %v1113 = vpow.pop %v1112
      %v1114 = vmul.f32 %v1015, 1.442695
      %v1115 = vpow.pop %v1114
      %v1116 = vmul.f32 %v1016, 1.442695
      %v1117 = vpow.pop %v1116
      %v1118 = vmul.f32 %v1017, 1.442695
      %v1119 = vpow.pop %v1118
      %v1120 = vmul.f32 %v1018, 1.442695
      %v1121 = vpow.pop %v1120
      %v1122 = vmul.f32 %v1019, 1.442695
      %v1123 = vpow.pop %v1122
      %v1124 = vmul.f32 %v1020, 1.442695
      %v1125 = vpow.pop %v1124
      %v1126 = vmul.f32 %v1021, 1.442695
      %v1127 = vpow.pop %v1126
      %v1128 = vmul.f32 %v1022, 1.442695
      %v1129 = vpow.pop %v1128
      %v1130 = vmul.f32 %v1023, 1.442695
      %v1131 = vpow.pop %v1130
      %v1132 = vmul.f32 %v1024, 1.442695
      %v1133 = vpow.pop %v1132
      %v1134 = vmul.f32 %v1025, 1.442695
      %v1135 = vpow.pop %v1134
      %v1136 = vmul.f32 %v1026, 1.442695
      %v1137 = vpow.pop %v1136
      %v1138 = vmul.f32 %v1027, 1.442695
      %v1139 = vpow.pop %v1138
      %v1140 = vmul.f32 %v1028, 1.442695
      %v1141 = vpow.pop %v1140
      %v1142 = vmul.f32 %v1029, 1.442695
      %v1143 = vpow.pop %v1142
      %v1144 = vmul.f32 %v1030, 1.442695
      %v1145 = vpow.pop %v1144
      %v1146 = vmul.f32 %v1031, 1.442695
      %v1147 = vpow.pop %v1146
      %v1148 = vmul.f32 %v1032, 1.442695
      %v1149 = vpow.pop %v1148
      %v1150 = vmul.f32 %v1033, 1.442695
      %v1151 = vpow.pop %v1150
      %v1152 = vmul.f32 %v1034, 1.442695
      %v1153 = vpow.pop %v1152
      %v1154 = vmul.f32 %v1035, 1.442695
      %v1155 = vpow.pop %v1154
      %v1156 = vmul.f32 %v1036, 1.442695
      %v1157 = vpow.pop %v1156
      %v1158 = vmul.f32 %v1037, 1.442695
      %v1159 = vpow.pop %v1158
      %v1160 = vmul.f32 %v1038, 1.442695
      %v1161 = vpow.pop %v1160
      %v1162 = vmul.f32 %v1039, 1.442695
      %v1163 = vpow.pop %v1162
      %v1164 = vmul.f32 %v1040, 1.442695
      %v1165 = vpow.pop %v1164
      %v1166 = vmul.f32 %v1041, 1.442695
      %v1167 = vpow.pop %v1166
      %v1168 = vmul.f32 %v1042, 1.442695
      %v1169 = vpow.pop %v1168
      %v1170 = vmul.f32 %v1043, 1.442695
      %v1171 = vpow.pop %v1170
      %v1172 = vadd.f32 %v1045, 1.0
      %v1173 = vadd.f32 %v1047, 1.0
      %v1174 = vadd.f32 %v1049, 1.0
      %v1175 = vadd.f32 %v1051, 1.0
      %v1176 = vadd.f32 %v1053, 1.0
      %v1177 = vadd.f32 %v1055, 1.0
      %v1178 = vadd.f32 %v1057, 1.0
      %v1179 = vadd.f32 %v1059, 1.0
      %v1180 = vadd.f32 %v1061, 1.0
      %v1181 = vadd.f32 %v1063, 1.0
      %v1182 = vadd.f32 %v1065, 1.0
      %v1183 = vadd.f32 %v1067, 1.0
      %v1184 = vadd.f32 %v1069, 1.0
      %v1185 = vadd.f32 %v1071, 1.0
      %v1186 = vadd.f32 %v1073, 1.0
      %v1187 = vadd.f32 %v1075, 1.0
      %v1188 = vadd.f32 %v1077, 1.0
      %v1189 = vadd.f32 %v1079, 1.0
      %v1190 = vadd.f32 %v1081, 1.0
      %v1191 = vadd.f32 %v1083, 1.0
      %v1192 = vadd.f32 %v1085, 1.0
      %v1193 = vadd.f32 %v1087, 1.0
      %v1194 = vadd.f32 %v1089, 1.0
      %v1195 = vadd.f32 %v1091, 1.0
      %v1196 = vadd.f32 %v1093, 1.0
      %v1197 = vadd.f32 %v1095, 1.0
      %v1198 = vadd.f32 %v1097, 1.0
      %v1199 = vadd.f32 %v1099, 1.0
      %v1200 = vadd.f32 %v1101, 1.0
      %v1201 = vadd.f32 %v1103, 1.0
      %v1202 = vadd.f32 %v1105, 1.0
      %v1203 = vadd.f32 %v1107, 1.0
      %v1204 = vadd.f32 %v1109, 1.0
      %v1205 = vadd.f32 %v1111, 1.0
      %v1206 = vadd.f32 %v1113, 1.0
      %v1207 = vadd.f32 %v1115, 1.0
      %v1208 = vadd.f32 %v1117, 1.0
      %v1209 = vadd.f32 %v1119, 1.0
      %v1210 = vadd.f32 %v1121, 1.0
      %v1211 = vadd.f32 %v1123, 1.0
      %v1212 = vadd.f32 %v1125, 1.0
      %v1213 = vadd.f32 %v1127, 1.0
      %v1214 = vadd.f32 %v1129, 1.0
      %v1215 = vadd.f32 %v1131, 1.0
      %v1216 = vadd.f32 %v1133, 1.0
      %v1217 = vadd.f32 %v1135, 1.0
      %v1218 = vadd.f32 %v1137, 1.0
      %v1219 = vadd.f32 %v1139, 1.0
      %v1220 = vadd.f32 %v1141, 1.0
      %v1221 = vadd.f32 %v1143, 1.0
      %v1222 = vadd.f32 %v1145, 1.0
      %v1223 = vadd.f32 %v1147, 1.0
      %v1224 = vadd.f32 %v1149, 1.0
      %v1225 = vadd.f32 %v1151, 1.0
      %v1226 = vadd.f32 %v1153, 1.0
      %v1227 = vadd.f32 %v1155, 1.0
      %v1228 = vadd.f32 %v1157, 1.0
      %v1229 = vadd.f32 %v1159, 1.0
      %v1230 = vadd.f32 %v1161, 1.0
      %v1231 = vadd.f32 %v1163, 1.0
      %v1232 = vadd.f32 %v1165, 1.0
      %v1233 = vadd.f32 %v1167, 1.0
      %v1234 = vadd.f32 %v1169, 1.0
      %v1235 = vadd.f32 %v1171, 1.0
      %v1236 = vrcp.pop %v1172
      %v1237 = vmul.f32 1.0, %v1236
      %v1238 = vrcp.pop %v1173
      %v1239 = vmul.f32 1.0, %v1238
      %v1240 = vrcp.pop %v1174
      %v1241 = vmul.f32 1.0, %v1240
      %v1242 = vrcp.pop %v1175
      %v1243 = vmul.f32 1.0, %v1242
      %v1244 = vrcp.pop %v1176
      %v1245 = vmul.f32 1.0, %v1244
      %v1246 = vrcp.pop %v1177
      %v1247 = vmul.f32 1.0, %v1246
      %v1248 = vrcp.pop %v1178
      %v1249 = vmul.f32 1.0, %v1248
      %v1250 = vrcp.pop %v1179
      %v1251 = vmul.f32 1.0, %v1250
      %v1252 = vrcp.pop %v1180
      %v1253 = vmul.f32 1.0, %v1252
      %v1254 = vrcp.pop %v1181
      %v1255 = vmul.f32 1.0, %v1254
      %v1256 = vrcp.pop %v1182
      %v1257 = vmul.f32 1.0, %v1256
      %v1258 = vrcp.pop %v1183
      %v1259 = vmul.f32 1.0, %v1258
      %v1260 = vrcp.pop %v1184
      %v1261 = vmul.f32 1.0, %v1260
      %v1262 = vrcp.pop %v1185
      %v1263 = vmul.f32 1.0, %v1262
      %v1264 = vrcp.pop %v1186
      %v1265 = vmul.f32 1.0, %v1264
      %v1266 = vrcp.pop %v1187
      %v1267 = vmul.f32 1.0, %v1266
      %v1268 = vrcp.pop %v1188
      %v1269 = vmul.f32 1.0, %v1268
      %v1270 = vrcp.pop %v1189
      %v1271 = vmul.f32 1.0, %v1270
      %v1272 = vrcp.pop %v1190
      %v1273 = vmul.f32 1.0, %v1272
      %v1274 = vrcp.pop %v1191
      %v1275 = vmul.f32 1.0, %v1274
      %v1276 = vrcp.pop %v1192
      %v1277 = vmul.f32 1.0, %v1276
      %v1278 = vrcp.pop %v1193
      %v1279 = vmul.f32 1.0, %v1278
      %v1280 = vrcp.pop %v1194
      %v1281 = vmul.f32 1.0, %v1280
      %v1282 = vrcp.pop %v1195
      %v1283 = vmul.f32 1.0, %v1282
      %v1284 = vrcp.pop %v1196
      %v1285 = vmul.f32 1.0, %v1284
      %v1286 = vrcp.pop %v1197
      %v1287 = vmul.f32 1.0, %v1286
      %v1288 = vrcp.pop %v1198
      %v1289 = vmul.f32 1.0, %v1288
      %v1290 = vrcp.pop %v1199
      %v1291 = vmul.f32 1.0, %v1290
      %v1292 = vrcp.pop %v1200
      %v1293 = vmul.f32 1.0, %v1292
      %v1294 = vrcp.pop %v1201
      %v1295 = vmul.f32 1.0, %v1294
      %v1296 = vrcp.pop %v1202
      %v1297 = vmul.f32 1.0, %v1296
      %v1298 = vrcp.pop %v1203
      %v1299 = vmul.f32 1.0, %v1298
      %v1300 = vrcp.pop %v1204
      %v1301 = vmul.f32 1.0, %v1300
      %v1302 = vrcp.pop %v1205
      %v1303 = vmul.f32 1.0, %v1302
      %v1304 = vrcp.pop %v1206
      %v1305 = vmul.f32 1.0, %v1304
      %v1306 = vrcp.pop %v1207
      %v1307 = vmul.f32 1.0, %v1306
      %v1308 = vrcp.pop %v1208
      %v1309 = vmul.f32 1.0, %v1308
      %v1310 = vrcp.pop %v1209
      %v1311 = vmul.f32 1.0, %v1310
      %v1312 = vrcp.pop %v1210
      %v1313 = vmul.f32 1.0, %v1312
      %v1314 = vrcp.pop %v1211
      %v1315 = vmul.f32 1.0, %v1314
      %v1316 = vrcp.pop %v1212
      %v1317 = vmul.f32 1.0, %v1316
      %v1318 = vrcp.pop %v1213
      %v1319 = vmul.f32 1.0, %v1318
      %v1320 = vrcp.pop %v1214
      %v1321 = vmul.f32 1.0, %v1320
      %v1322 = vrcp.pop %v1215
      %v1323 = vmul.f32 1.0, %v1322
      %v1324 = vrcp.pop %v1216
      %v1325 = vmul.f32 1.0, %v1324
      %v1326 = vrcp.pop %v1217
      %v1327 = vmul.f32 1.0, %v1326
      %v1328 = vrcp.pop %v1218
      %v1329 = vmul.f32 1.0, %v1328
      %v1330 = vrcp.pop %v1219
      %v1331 = vmul.f32 1.0, %v1330
      %v1332 = vrcp.pop %v1220
      %v1333 = vmul.f32 1.0, %v1332
      %v1334 = vrcp.pop %v1221
      %v1335 = vmul.f32 1.0, %v1334
      %v1336 = vrcp.pop %v1222
      %v1337 = vmul.f32 1.0, %v1336
      %v1338 = vrcp.pop %v1223
      %v1339 = vmul.f32 1.0, %v1338
      %v1340 = vrcp.pop %v1224
      %v1341 = vmul.f32 1.0, %v1340
      %v1342 = vrcp.pop %v1225
      %v1343 = vmul.f32 1.0, %v1342
      %v1344 = vrcp.pop %v1226
      %v1345 = vmul.f32 1.0, %v1344
      %v1346 = vrcp.pop %v1227
      %v1347 = vmul.f32 1.0, %v1346
      %v1348 = vrcp.pop %v1228
      %v1349 = vmul.f32 1.0, %v1348
      %v1350 = vrcp.pop %v1229
      %v1351 = vmul.f32 1.0, %v1350
      %v1352 = vrcp.pop %v1230
      %v1353 = vmul.f32 1.0, %v1352
      %v1354 = vrcp.pop %v1231
      %v1355 = vmul.f32 1.0, %v1354
      %v1356 = vrcp.pop %v1232
      %v1357 = vmul.f32 1.0, %v1356
      %v1358 = vrcp.pop %v1233
      %v1359 = vmul.f32 1.0, %v1358
      %v1360 = vrcp.pop %v1234
      %v1361 = vmul.f32 1.0, %v1360
      %v1362 = vrcp.pop %v1235
      %v1363 = vmul.f32 1.0, %v1362
      %v1364 = vmul.f32 %v916, %v1237
      %v1365 = vmul.f32 %v917, %v1239
      %v1366 = vmul.f32 %v918, %v1241
      %v1367 = vmul.f32 %v919, %v1243
      %v1368 = vmul.f32 %v920, %v1245
      %v1369 = vmul.f32 %v921, %v1247
      %v1370 = vmul.f32 %v922, %v1249
      %v1371 = vmul.f32 %v923, %v1251
      %v1372 = vmul.f32 %v924, %v1253
      %v1373 = vmul.f32 %v925, %v1255
      %v1374 = vmul.f32 %v926, %v1257
      %v1375 = vmul.f32 %v927, %v1259
      %v1376 = vmul.f32 %v928, %v1261
      %v1377 = vmul.f32 %v929, %v1263
      %v1378 = vmul.f32 %v930, %v1265
      %v1379 = vmul.f32 %v931, %v1267
      %v1380 = vmul.f32 %v932, %v1269
      %v1381 = vmul.f32 %v933, %v1271
      %v1382 = vmul.f32 %v934, %v1273
      %v1383 = vmul.f32 %v935, %v1275
      %v1384 = vmul.f32 %v936, %v1277
      %v1385 = vmul.f32 %v937, %v1279
      %v1386 = vmul.f32 %v938, %v1281
      %v1387 = vmul.f32 %v939, %v1283
      %v1388 = vmul.f32 %v940, %v1285
      %v1389 = vmul.f32 %v941, %v1287
      %v1390 = vmul.f32 %v942, %v1289
      %v1391 = vmul.f32 %v943, %v1291
      %v1392 = vmul.f32 %v944, %v1293
      %v1393 = vmul.f32 %v945, %v1295
      %v1394 = vmul.f32 %v946, %v1297
      %v1395 = vmul.f32 %v947, %v1299
      %v1396 = vmul.f32 %v948, %v1301
      %v1397 = vmul.f32 %v949, %v1303
      %v1398 = vmul.f32 %v950, %v1305
      %v1399 = vmul.f32 %v951, %v1307
      %v1400 = vmul.f32 %v952, %v1309
      %v1401 = vmul.f32 %v953, %v1311
      %v1402 = vmul.f32 %v954, %v1313
      %v1403 = vmul.f32 %v955, %v1315
      %v1404 = vmul.f32 %v956, %v1317
      %v1405 = vmul.f32 %v957, %v1319
      %v1406 = vmul.f32 %v958, %v1321
      %v1407 = vmul.f32 %v959, %v1323
      %v1408 = vmul.f32 %v960, %v1325
      %v1409 = vmul.f32 %v961, %v1327
      %v1410 = vmul.f32 %v962, %v1329
      %v1411 = vmul.f32 %v963, %v1331
      %v1412 = vmul.f32 %v964, %v1333
      %v1413 = vmul.f32 %v965, %v1335
      %v1414 = vmul.f32 %v966, %v1337
      %v1415 = vmul.f32 %v967, %v1339
      %v1416 = vmul.f32 %v968, %v1341
      %v1417 = vmul.f32 %v969, %v1343
      %v1418 = vmul.f32 %v970, %v1345
      %v1419 = vmul.f32 %v971, %v1347
      %v1420 = vmul.f32 %v972, %v1349
      %v1421 = vmul.f32 %v973, %v1351
      %v1422 = vmul.f32 %v974, %v1353
      %v1423 = vmul.f32 %v975, %v1355
      %v1424 = vmul.f32 %v976, %v1357
      %v1425 = vmul.f32 %v977, %v1359
      %v1426 = vmul.f32 %v978, %v1361
      %v1427 = vmul.f32 %v979, %v1363
      %1428 = vst [vmem:[#allocation8] sm:$0xff] %v1364
      %1429 = vst [vmem:[#allocation8 + $0x8] sm:$0xff] %v1365
      %1430 = vst [vmem:[#allocation8 + $0x10] sm:$0xff] %v1366
      %1431 = vst [vmem:[#allocation8 + $0x18] sm:$0xff] %v1367
      %1432 = vst [vmem:[#allocation8 + $0x20] sm:$0xff] %v1368
      %1433 = vst [vmem:[#allocation8 + $0x28] sm:$0xff] %v1369
      %1434 = vst [vmem:[#allocation8 + $0x30] sm:$0xff] %v1370
      %1435 = vst [vmem:[#allocation8 + $0x38] sm:$0xff] %v1371
      %1436 = vst [vmem:[#allocation8 + $0x40] sm:$0xff] %v1372
      %1437 = vst [vmem:[#allocation8 + $0x48] sm:$0xff] %v1373
      %1438 = vst [vmem:[#allocation8 + $0x50] sm:$0xff] %v1374
      %1439 = vst [vmem:[#allocation8 + $0x58] sm:$0xff] %v1375
      %1440 = vst [vmem:[#allocation8 + $0x60] sm:$0xff] %v1376
      %1441 = vst [vmem:[#allocation8 + $0x68] sm:$0xff] %v1377
      %1442 = vst [vmem:[#allocation8 + $0x70] sm:$0xff] %v1378
      %1443 = vst [vmem:[#allocation8 + $0x78] sm:$0xff] %v1379
      %1444 = vst [vmem:[#allocation8 + $0x80] sm:$0xff] %v1380
      %1445 = vst [vmem:[#allocation8 + $0x88] sm:$0xff] %v1381
      %1446 = vst [vmem:[#allocation8 + $0x90] sm:$0xff] %v1382
      %1447 = vst [vmem:[#allocation8 + $0x98] sm:$0xff] %v1383
      %1448 = vst [vmem:[#allocation8 + $0xa0] sm:$0xff] %v1384
      %1449 = vst [vmem:[#allocation8 + $0xa8] sm:$0xff] %v1385
      %1450 = vst [vmem:[#allocation8 + $0xb0] sm:$0xff] %v1386
      %1451 = vst [vmem:[#allocation8 + $0xb8] sm:$0xff] %v1387
      %1452 = vst [vmem:[#allocation8 + $0xc0] sm:$0xff] %v1388
      %1453 = vst [vmem:[#allocation8 + $0xc8] sm:$0xff] %v1389
      %1454 = vst [vmem:[#allocation8 + $0xd0] sm:$0xff] %v1390
      %1455 = vst [vmem:[#allocation8 + $0xd8] sm:$0xff] %v1391
      %1456 = vst [vmem:[#allocation8 + $0xe0] sm:$0xff] %v1392
      %1457 = vst [vmem:[#allocation8 + $0xe8] sm:$0xff] %v1393
      %1458 = vst [vmem:[#allocation8 + $0xf0] sm:$0xff] %v1394
      %1459 = vst [vmem:[#allocation8 + $0xf8] sm:$0xff] %v1395
      %1460 = vst [vmem:[#allocation8 + $0x100] sm:$0xff] %v1396
      %1461 = vst [vmem:[#allocation8 + $0x108] sm:$0xff] %v1397
      %1462 = vst [vmem:[#allocation8 + $0x110] sm:$0xff] %v1398
      %1463 = vst [vmem:[#allocation8 + $0x118] sm:$0xff] %v1399
      %1464 = vst [vmem:[#allocation8 + $0x120] sm:$0xff] %v1400
      %1465 = vst [vmem:[#allocation8 + $0x128] sm:$0xff] %v1401
      %1466 = vst [vmem:[#allocation8 + $0x130] sm:$0xff] %v1402
      %1467 = vst [vmem:[#allocation8 + $0x138] sm:$0xff] %v1403
      %1468 = vst [vmem:[#allocation8 + $0x140] sm:$0xff] %v1404
      %1469 = vst [vmem:[#allocation8 + $0x148] sm:$0xff] %v1405
      %1470 = vst [vmem:[#allocation8 + $0x150] sm:$0xff] %v1406
      %1471 = vst [vmem:[#allocation8 + $0x158] sm:$0xff] %v1407
      %1472 = vst [vmem:[#allocation8 + $0x160] sm:$0xff] %v1408
      %1473 = vst [vmem:[#allocation8 + $0x168] sm:$0xff] %v1409
      %1474 = vst [vmem:[#allocation8 + $0x170] sm:$0xff] %v1410
      %1475 = vst [vmem:[#allocation8 + $0x178] sm:$0xff] %v1411
      %1476 = vst [vmem:[#allocation8 + $0x180] sm:$0xff] %v1412
      %1477 = vst [vmem:[#allocation8 + $0x188] sm:$0xff] %v1413
      %1478 = vst [vmem:[#allocation8 + $0x190] sm:$0xff] %v1414
      %1479 = vst [vmem:[#allocation8 + $0x198] sm:$0xff] %v1415
      %1480 = vst [vmem:[#allocation8 + $0x1a0] sm:$0xff] %v1416
      %1481 = vst [vmem:[#allocation8 + $0x1a8] sm:$0xff] %v1417
      %1482 = vst [vmem:[#allocation8 + $0x1b0] sm:$0xff] %v1418
      %1483 = vst [vmem:[#allocation8 + $0x1b8] sm:$0xff] %v1419
      %1484 = vst [vmem:[#allocation8 + $0x1c0] sm:$0xff] %v1420
      %1485 = vst [vmem:[#allocation8 + $0x1c8] sm:$0xff] %v1421
      %1486 = vst [vmem:[#allocation8 + $0x1d0] sm:$0xff] %v1422
      %1487 = vst [vmem:[#allocation8 + $0x1d8] sm:$0xff] %v1423
      %1488 = vst [vmem:[#allocation8 + $0x1e0] sm:$0xff] %v1424
      %1489 = vst [vmem:[#allocation8 + $0x1e8] sm:$0xff] %v1425
      %1490 = vst [vmem:[#allocation8 + $0x1f0] sm:$0xff] %v1426
      %1491 = vst [vmem:[#allocation8 + $0x1f8] sm:$0xff] %v1427
    $region33: #{tpu_custom_call.1} parent=1 // pred_fallthru
      _
    // Predicated region
    $region34: #{tpu_custom_call.1} parent=1 // pred_check
      _
    $region35: #{tpu_custom_call.1} parent=1 // pred_check_branch
      %1493 = sbr.rel (0) target = $region37
    $region36: #{tpu_custom_call.1} parent=1 // pred_region
      %s1495 = ssub.s32 8192, 8192
      %1496 = vsyncadd [#allocation5], %s1495
      %s1497 = sshll.u32 [#allocation8], 4
      %s1498 = int_to_ptr.vmem [resolvable:$true] %s1497
      %1503 = dma.vmem_to_hbm [thread:$0]  %s1498, 8192, %s4, [#allocation5], 128, 128, 8
    $region37: #{tpu_custom_call.1} parent=1 // pred_fallthru
      _
    // Predicated region
    $region38: #{tpu_custom_call.1} parent=1 // pred_check
      _
    $region39: #{tpu_custom_call.1} parent=1 // pred_check_branch
      %1505 = sbr.rel (0) target = $region41
    $region40: #{tpu_custom_call.1} parent=1 // pred_region
      %1506 = dma.done [#allocation5], 8192
    $region41: #{tpu_custom_call.1} parent=1 // pred_fallthru
      _
    %1507 = vsyncpa [#allocation4], 1
    %1508 = vsyncpa [#allocation7], 1
    %1509 = vsyncpa [#allocation5], 1

</llo_original>
